<compile_context>
chip_gen: v6e
topology: v6e:2x2x1
jax: 0.10.0
libtpu: 0.0.40
codegen_flags: <defaults>
</compile_context>

<pallas_src>
import functools

import jax
import jax.numpy as jnp
from jax.experimental import pallas as pl
from jax.experimental.pallas import tpu as pltpu

N_FEATURES = 1408          # tf_efficientnet_b2 classifier.in_features
STEM_CH = 32               # tf_efficientnet_b2 stem width
BN_EPS = 1e-3
KP = 16                    # 3*3*in_chans(=1) = 9 patch taps, zero-padded to 16


def _round_up(x, m):
    return (x + m - 1) // m * m


# ----------------------------------------------------------------------------
# Fused Pallas kernel: stem conv -> 1x1 head -> SiLU -> avg-pool -> fc
# ----------------------------------------------------------------------------
def _fused_stem_head_pool_fc_kernel(
        patch_ref, stem_w_ref, stem_b_ref, head_w_ref, head_b_ref,
        fcw_ref, fcb_ref, out_ref, acc_ref, *, tm, m_valid):
    """Grid = (B, M_pad // tm); grid axis 1 accumulates the global pool."""
    m_idx = pl.program_id(1)

    @pl.when(m_idx == 0)
    def _init():
        acc_ref[...] = jnp.zeros_like(acc_ref)

    # ---- stem conv 3x3 s2 (BN folded, lowered to a matmul over the 9 taps),
    # bf16 operands on the MXU with f32 accumulation.  SiLU stays in f32
    # (v5e's VPU/EUP have no bf16).
    patches = patch_ref[0]                                     # (tm, KP) bf16
    stem = jnp.dot(patches, stem_w_ref[...],
                   preferred_element_type=jnp.float32)         # (tm, 32) f32
    stem = stem + stem_b_ref[...]
    stem = stem * jax.nn.sigmoid(stem)                         # SiLU (EUP)

    # ---- 1x1 conv head 32 -> 1408 (BN folded) + SiLU; never leaves VMEM.
    feats = jnp.dot(stem.astype(jnp.bfloat16), head_w_ref[...],
                    preferred_element_type=jnp.float32)        # (tm, 1408) f32
    feats = feats + head_b_ref[...]
    feats = feats * jax.nn.sigmoid(feats)

    # ---- global average pool: accumulate a per-channel row-sum.  Rows past
    # the true Ho*Wo are padding (would contribute silu(bias) terms) -> mask.
    row = m_idx * tm + jax.lax.broadcasted_iota(jnp.int32, (tm, 1), 0)
    feats = jnp.where(row < m_valid, feats, 0.0)
    acc_ref[...] += jnp.sum(feats, axis=0, keepdims=True)      # (1, 1408)

    # ---- finalize: fc(1408 -> 1) as a VPU multiply + lane reduction (avoids
    # a degenerate N=1 MXU matmul); 1/(Ho*Wo) is pre-folded into fcw_ref.
    @pl.when(m_idx == pl.num_programs(1) - 1)
    def _finalize():
        tot = jnp.sum(acc_ref[...] * fcw_ref[...], axis=1, keepdims=True)
        out_ref[...] = jnp.broadcast_to(tot + fcb_ref[...], out_ref.shape)


def fused_backbone_head(patches, stem_w, stem_b, head_w, head_b, fcw, fcb,
                        *, m_valid, tm):
    """patches: (B, M_pad, KP) bf16.  Returns (B, 1) f32."""
    B, M_pad, kp = patches.shape
    grid = (B, M_pad // tm)
    kernel = functools.partial(_fused_stem_head_pool_fc_kernel,
                               tm=tm, m_valid=m_valid)
    out = pl.pallas_call(
        kernel,
        # lane-dense (1,1,128) output block per batch element; sliced below.
        out_shape=jax.ShapeDtypeStruct((B, 1, 128), jnp.float32),
        grid_spec=pltpu.PrefetchScalarGridSpec(
            num_scalar_prefetch=0,
            grid=grid,
            in_specs=[
                pl.BlockSpec((1, tm, kp), lambda b, m: (b, m, 0)),
                pl.BlockSpec((kp, STEM_CH), lambda b, m: (0, 0)),
                pl.BlockSpec((1, STEM_CH), lambda b, m: (0, 0)),
                pl.BlockSpec((STEM_CH, N_FEATURES), lambda b, m: (0, 0)),
                pl.BlockSpec((1, N_FEATURES), lambda b, m: (0, 0)),
                pl.BlockSpec((1, N_FEATURES), lambda b, m: (0, 0)),
                pl.BlockSpec((1, 1), lambda b, m: (0, 0)),
            ],
            out_specs=pl.BlockSpec((1, 1, 128), lambda b, m: (b, 0, 0)),
            scratch_shapes=[pltpu.VMEM((1, N_FEATURES), jnp.float32)],
        ),
        compiler_params=pltpu.CompilerParams(
            # batch axis shards across v7x's two TensorCores; the pool
            # accumulation axis must stay "arbitrary".
            dimension_semantics=("parallel", "arbitrary")),
    )(patches, stem_w, stem_b, head_w, head_b, fcw, fcb)
    return out[:, 0, :1]                                       # (B, 1)


# ----------------------------------------------------------------------------
# Parameter construction (deterministic, synthetic — no checkpoint load)
# ----------------------------------------------------------------------------
def _fold_bn(w, gamma, beta, mean, var, eps=BN_EPS):
    """Fold BatchNorm (inference) into a preceding conv: returns (w', bias')."""
    scale = gamma / jnp.sqrt(var + eps)          # (Cout,)
    w_folded = w * scale                         # broadcast over last axis Cout
    bias = beta - mean * scale
    return w_folded, bias


def init_params(key):
    ks = jax.random.split(key, 8)
    p = {}
    # stem conv: (kh, kw, cin, cout) = (3, 3, 1, 32), tf_efficientnet_b2 stem
    stem_w = jax.random.normal(ks[0], (3, 3, 1, STEM_CH), jnp.float32) * 0.1
    stem_g = 1.0 + 0.01 * jax.random.normal(ks[1], (STEM_CH,), jnp.float32)
    stem_b = 0.01 * jax.random.normal(ks[2], (STEM_CH,), jnp.float32)
    stem_m = 0.1 * jax.random.normal(ks[3], (STEM_CH,), jnp.float32)
    stem_v = 1.0 + 0.1 * jnp.abs(jax.random.normal(ks[4], (STEM_CH,), jnp.float32))
    p["stem_w"], p["stem_bias"] = _fold_bn(stem_w, stem_g, stem_b, stem_m, stem_v)

    # 1x1 conv-head to n_features=1408, BN folded, SiLU
    head_w = jax.random.normal(ks[5], (STEM_CH, N_FEATURES), jnp.float32) * (
        1.0 / jnp.sqrt(jnp.float32(STEM_CH)))
    p["head_w"], p["head_bias"] = _fold_bn(
        head_w,
        jnp.ones((N_FEATURES,), jnp.float32),
        jnp.zeros((N_FEATURES,), jnp.float32),
        jnp.zeros((N_FEATURES,), jnp.float32),
        jnp.ones((N_FEATURES,), jnp.float32),
    )

    # fc: Linear(n_features, 1)   (stored as (C, 1) == PyTorch weight^T)
    p["fc_w"] = jax.random.normal(ks[6], (N_FEATURES, 1), jnp.float32) * (
        1.0 / jnp.sqrt(jnp.float32(N_FEATURES)))
    p["fc_b"] = jax.random.normal(ks[7], (1,), jnp.float32) * 0.01
    return p


# ----------------------------------------------------------------------------
# Forward pass (glue in JAX, hot path in one fused Pallas kernel)
# ----------------------------------------------------------------------------
def _im2col_3x3_s2_same(x_nhwc):
    """3x3 stride-2 patch extraction with TF-style SAME padding (asymmetric
    (0,1)/(0,1) for even spatial dims, matching tf_efficientnet's stem).
    Returns (B, Ho, Wo, 9) in (dy, dx, cin) order.
    TODO(synk): for production resolutions, gather the 3x3 window inside the
    kernel from a padded NHWC tile instead of a 9x duplicated patches array."""
    B, H, W, Cin = x_nhwc.shape
    Ho, Wo = (H + 1) // 2, (W + 1) // 2
    ph = max((Ho - 1) * 2 + 3 - H, 0)
    pw = max((Wo - 1) * 2 + 3 - W, 0)
    xp = jnp.pad(x_nhwc, ((0, 0), (ph // 2, ph - ph // 2),
                          (pw // 2, pw - pw // 2), (0, 0)))
    cols = []
    for dy in range(3):
        for dx in range(3):
            cols.append(xp[:, dy:dy + 2 * Ho:2, dx:dx + 2 * Wo:2, :])
    return jnp.concatenate(cols, axis=-1)


@jax.jit
def custom_model_forward(params, x_nchw):
    """x_nchw: (B, 1, H, W) float32, exactly like the PyTorch module input."""
    B = x_nchw.shape[0]
    x = jnp.transpose(x_nchw, (0, 2, 3, 1))                    # -> NHWC (glue)

    patches = _im2col_3x3_s2_same(x)                           # (B, Ho, Wo, 9)
    Ho, Wo = patches.shape[1], patches.shape[2]
    M = Ho * Wo

    # M-tiling: tm multiple of 16 (bf16 sublane packing), capped so the f32
    # (tm, 1408) intermediate stays well inside the scoped-VMEM default on all
    # of v5e / v6e / v7x.  Padded rows are masked inside the kernel.
    tm = min(256, _round_up(M, 16))
    M_pad = _round_up(M, tm)
    patches = patches.reshape(B, M, 9)
    patches = jnp.pad(patches, ((0, 0), (0, M_pad - M), (0, KP - 9)))
    patches = patches.astype(jnp.bfloat16)                     # halves DMA

    stem_w = jnp.pad(params["stem_w"].reshape(9, STEM_CH),
                     ((0, KP - 9), (0, 0))).astype(jnp.bfloat16)
    stem_b = params["stem_bias"].reshape(1, STEM_CH).astype(jnp.float32)
    head_w = params["head_w"].astype(jnp.bfloat16)
    head_b = params["head_bias"].reshape(1, N_FEATURES).astype(jnp.float32)
    # fold the 1/(Ho*Wo) of AdaptiveAvgPool2d(1) into the fc weight (sum-then-
    # scale inside the kernel becomes a plain sum).
    fcw = (params["fc_w"].reshape(1, N_FEATURES)
           / jnp.float32(M)).astype(jnp.float32)
    fcb = params["fc_b"].reshape(1, 1).astype(jnp.float32)

    return fused_backbone_head(patches, stem_w, stem_b, head_w, head_b,
                               fcw, fcb, m_valid=M, tm=tm)      # (B, 1)


if __name__ == "__main__":
    key = jax.random.PRNGKey(0)
    k_x, k_p = jax.random.split(key)
    # Small shapes consistent with the module: batch=2, in_chans=1, 16x16 image.
    x = jax.random.normal(k_x, (2, 1, 16, 16), jnp.float32)
    params = init_params(k_p)
    y = jax.block_until_ready(custom_model_forward(params, x))
    assert y.shape == (2, 1) and y.dtype == jnp.float32
    print("KERNEL_OK")
</pallas_src>

<mosaic_0001>
module attributes {stable_mosaic.version = 11 : i64} {
  func.func @_fused_stem_head_pool_fc_kernel(%arg0: i32, %arg1: i32, %arg2: memref<1x64x16xbf16, #tpu.memory_space<vmem>>, %arg3: memref<16x32xbf16, #tpu.memory_space<vmem>>, %arg4: memref<1x32xf32, #tpu.memory_space<vmem>>, %arg5: memref<32x1408xbf16, #tpu.memory_space<vmem>>, %arg6: memref<1x1408xf32, #tpu.memory_space<vmem>>, %arg7: memref<1x1408xf32, #tpu.memory_space<vmem>>, %arg8: memref<1x1xf32, #tpu.memory_space<vmem>>, %arg9: memref<1x1x128xf32, #tpu.memory_space<vmem>>, %arg10: memref<1x1408xf32, #tpu.memory_space<vmem>>) attributes {dimension_semantics = [#tpu.dimension_semantics<parallel>, #tpu.dimension_semantics<arbitrary>], iteration_bounds = array<i64: 2, 1>, scalar_prefetch = 0 : i64, scratch_operands = 1 : i64, tpu.core_type = #tpu.core_type<tc>, window_params = [{transform_indices = @transform_0, window_bounds = array<i64: 1, 64, 16>}, {pipeline_mode = #tpu.pipeline_mode<synchronous>, transform_indices = @transform_1, window_bounds = array<i64: 16, 32>}, {pipeline_mode = #tpu.pipeline_mode<synchronous>, transform_indices = @transform_2, window_bounds = array<i64: 1, 32>}, {pipeline_mode = #tpu.pipeline_mode<synchronous>, transform_indices = @transform_3, window_bounds = array<i64: 32, 1408>}, {pipeline_mode = #tpu.pipeline_mode<synchronous>, transform_indices = @transform_4, window_bounds = array<i64: 1, 1408>}, {pipeline_mode = #tpu.pipeline_mode<synchronous>, transform_indices = @transform_5, window_bounds = array<i64: 1, 1408>}, {pipeline_mode = #tpu.pipeline_mode<synchronous>, transform_indices = @transform_6, window_bounds = array<i64: 1, 1>}, {transform_indices = @transform_7, window_bounds = array<i64: 1, 1, 128>}]} {
    %c0_i32 = arith.constant 0 : i32
    %0 = arith.cmpi eq, %arg1, %c0_i32 : i32
    %1 = arith.extui %0 : i1 to i32
    %c0_i32_0 = arith.constant 0 : i32
    %2 = arith.cmpi ne, %1, %c0_i32_0 : i32
    scf.if %2 {
      %cst_23 = arith.constant 0.000000e+00 : f32
      %46 = vector.broadcast %cst_23 : f32 to vector<1x1408xf32>
      %c0_24 = arith.constant 0 : index
      %c0_25 = arith.constant 0 : index
      %47 = vector.load %arg10[%c0_24, %c0_25] : memref<1x1408xf32, #tpu.memory_space<vmem>>, vector<1x1408xf32>
      tpu.vector_store %arg10[%c0_24, %c0_25], %46 {strides = array<i32>} : memref<1x1408xf32, #tpu.memory_space<vmem>>, vector<1x1408xf32>,
    } else {
    }
    %c0 = arith.constant 0 : index
    %c0_1 = arith.constant 0 : index
    %c0_2 = arith.constant 0 : index
    %3 = vector.load %arg2[%c0, %c0_1, %c0_2] : memref<1x64x16xbf16, #tpu.memory_space<vmem>>, vector<1x64x16xbf16>
    %4 = vector.shape_cast %3 : vector<1x64x16xbf16> to vector<64x16xbf16>
    %c0_3 = arith.constant 0 : index
    %c0_4 = arith.constant 0 : index
    %5 = vector.load %arg3[%c0_3, %c0_4] : memref<16x32xbf16, #tpu.memory_space<vmem>>, vector<16x32xbf16>
    %cst = arith.constant dense<0.000000e+00> : vector<64x32xf32>
    %6 = tpu.matmul %4, %5, %cst {dimension_numbers = #tpu.dot_dimension_numbers<[1], [0], [0], [1], [0, 0, 1, 1], [], []>} : vector<64x16xbf16>, vector<16x32xbf16>, vector<64x32xf32> -> vector<64x32xf32>
    %c0_5 = arith.constant 0 : index
    %c0_6 = arith.constant 0 : index
    %7 = vector.load %arg4[%c0_5, %c0_6] : memref<1x32xf32, #tpu.memory_space<vmem>>, vector<1x32xf32>
    %8 = vector.broadcast %7 : vector<1x32xf32> to vector<64x32xf32>
    %9 = arith.addf %6, %8 : vector<64x32xf32>
    %10 = arith.negf %9 : vector<64x32xf32>
    %11 = math.exp %10 : vector<64x32xf32>
    %cst_7 = arith.constant 1.000000e+00 : f32
    %12 = vector.broadcast %cst_7 : f32 to vector<64x32xf32>
    %13 = arith.addf %12, %11 : vector<64x32xf32>
    %14 = arith.divf %12, %13 : vector<64x32xf32>
    %15 = arith.mulf %9, %14 : vector<64x32xf32>
    %16 = arith.truncf %15 : vector<64x32xf32> to vector<64x32xbf16>
    %c0_8 = arith.constant 0 : index
    %c0_9 = arith.constant 0 : index
    %17 = vector.load %arg5[%c0_8, %c0_9] : memref<32x1408xbf16, #tpu.memory_space<vmem>>, vector<32x1408xbf16>
    %cst_10 = arith.constant dense<0.000000e+00> : vector<64x1408xf32>
    %18 = tpu.matmul %16, %17, %cst_10 {dimension_numbers = #tpu.dot_dimension_numbers<[1], [0], [0], [1], [0, 0, 1, 1], [], []>} : vector<64x32xbf16>, vector<32x1408xbf16>, vector<64x1408xf32> -> vector<64x1408xf32>
    %c0_11 = arith.constant 0 : index
    %c0_12 = arith.constant 0 : index
    %19 = vector.load %arg6[%c0_11, %c0_12] : memref<1x1408xf32, #tpu.memory_space<vmem>>, vector<1x1408xf32>
    %20 = vector.broadcast %19 : vector<1x1408xf32> to vector<64x1408xf32>
    %21 = arith.addf %18, %20 : vector<64x1408xf32>
    %22 = arith.negf %21 : vector<64x1408xf32>
    %23 = math.exp %22 : vector<64x1408xf32>
    %cst_13 = arith.constant 1.000000e+00 : f32
    %24 = vector.broadcast %cst_13 : f32 to vector<64x1408xf32>
    %25 = arith.addf %24, %23 : vector<64x1408xf32>
    %26 = arith.divf %24, %25 : vector<64x1408xf32>
    %27 = arith.mulf %21, %26 : vector<64x1408xf32>
    %c64_i32 = arith.constant 64 : i32
    %28 = arith.muli %arg1, %c64_i32 : i32
    %29 = tpu.iota {dimensions = array<i32: 0>} : vector<64x1xi32>
    %30 = vector.broadcast %28 : i32 to vector<64x1xi32>
    %31 = arith.addi %30, %29 : vector<64x1xi32>
    %c64_i32_14 = arith.constant 64 : i32
    %32 = vector.broadcast %c64_i32_14 : i32 to vector<64x1xi32>
    %33 = arith.cmpi slt, %31, %32 : vector<64x1xi32>
    %cst_15 = arith.constant 0.000000e+00 : f32
    %34 = vector.shape_cast %33 : vector<64x1xi1> to vector<64x1xi1>
    %35 = vector.broadcast %34 : vector<64x1xi1> to vector<64x1408xi1>
    %36 = vector.broadcast %cst_15 : f32 to vector<64x1408xf32>
    %37 = arith.select %35, %27, %36 : vector<64x1408xi1>, vector<64x1408xf32>
    %c0_16 = arith.constant 0 : index
    %c0_17 = arith.constant 0 : index
    %38 = vector.load %arg10[%c0_16, %c0_17] : memref<1x1408xf32, #tpu.memory_space<vmem>>, vector<1x1408xf32>
    %cst_18 = arith.constant dense<0.000000e+00> : vector<1408xf32>
    %39 = vector.multi_reduction <add>, %37, %cst_18 [0] : vector<64x1408xf32> to vector<1408xf32>
    %40 = vector.shape_cast %39 : vector<1408xf32> to vector<1x1408xf32>
    %41 = arith.addf %38, %40 : vector<1x1408xf32>
    %c0_19 = arith.constant 0 : index
    %c0_20 = arith.constant 0 : index
    %42 = vector.load %arg10[%c0_19, %c0_20] : memref<1x1408xf32, #tpu.memory_space<vmem>>, vector<1x1408xf32>
    tpu.vector_store %arg10[%c0_19, %c0_20], %41 {strides = array<i32>} : memref<1x1408xf32, #tpu.memory_space<vmem>>, vector<1x1408xf32>,
    %c0_i32_21 = arith.constant 0 : i32
    %43 = arith.cmpi eq, %arg1, %c0_i32_21 : i32
    %44 = arith.extui %43 : i1 to i32
    %c0_i32_22 = arith.constant 0 : i32
    %45 = arith.cmpi ne, %44, %c0_i32_22 : i32
    scf.if %45 {
      %c0_23 = arith.constant 0 : index
      %c0_24 = arith.constant 0 : index
      %46 = vector.load %arg10[%c0_23, %c0_24] : memref<1x1408xf32, #tpu.memory_space<vmem>>, vector<1x1408xf32>
      %c0_25 = arith.constant 0 : index
      %c0_26 = arith.constant 0 : index
      %47 = vector.load %arg7[%c0_25, %c0_26] : memref<1x1408xf32, #tpu.memory_space<vmem>>, vector<1x1408xf32>
      %48 = arith.mulf %46, %47 : vector<1x1408xf32>
      %cst_27 = arith.constant dense<0.000000e+00> : vector<1xf32>
      %49 = vector.multi_reduction <add>, %48, %cst_27 [1] : vector<1x1408xf32> to vector<1xf32>
      %50 = vector.shape_cast %49 : vector<1xf32> to vector<1x1xf32>
      %c0_28 = arith.constant 0 : index
      %c0_29 = arith.constant 0 : index
      %51 = vector.load %arg8[%c0_28, %c0_29] : memref<1x1xf32, #tpu.memory_space<vmem>>, vector<1x1xf32>
      %52 = arith.addf %50, %51 : vector<1x1xf32>
      %53 = vector.shape_cast %52 : vector<1x1xf32> to vector<1x1x1xf32>
      %54 = vector.broadcast %53 : vector<1x1x1xf32> to vector<1x1x128xf32>
      %c0_30 = arith.constant 0 : index
      %c0_31 = arith.constant 0 : index
      %c0_32 = arith.constant 0 : index
      %55 = vector.load %arg9[%c0_30, %c0_31, %c0_32] : memref<1x1x128xf32, #tpu.memory_space<vmem>>, vector<1x1x128xf32>
      tpu.vector_store %arg9[%c0_30, %c0_31, %c0_32], %54 {strides = array<i32>} : memref<1x1x128xf32, #tpu.memory_space<vmem>>, vector<1x1x128xf32>,
    } else {
    }
    return
  }
  func.func @transform_0(%arg0: i32, %arg1: i32) -> (i32, i32, i32) {
    %c0_i32 = arith.constant 0 : i32
    %c0_i32_0 = arith.constant 0 : i32
    return %arg0, %arg1, %c0_i32 : i32, i32, i32
  }
  func.func @transform_1(%arg0: i32, %arg1: i32) -> (i32, i32) {
    %c0_i32 = arith.constant 0 : i32
    %c0_i32_0 = arith.constant 0 : i32
    %c0_i32_1 = arith.constant 0 : i32
    return %c0_i32, %c0_i32_0 : i32, i32
  }
  func.func @transform_2(%arg0: i32, %arg1: i32) -> (i32, i32) {
    %c0_i32 = arith.constant 0 : i32
    %c0_i32_0 = arith.constant 0 : i32
    %c0_i32_1 = arith.constant 0 : i32
    return %c0_i32, %c0_i32_0 : i32, i32
  }
  func.func @transform_3(%arg0: i32, %arg1: i32) -> (i32, i32) {
    %c0_i32 = arith.constant 0 : i32
    %c0_i32_0 = arith.constant 0 : i32
    %c0_i32_1 = arith.constant 0 : i32
    return %c0_i32, %c0_i32_0 : i32, i32
  }
  func.func @transform_4(%arg0: i32, %arg1: i32) -> (i32, i32) {
    %c0_i32 = arith.constant 0 : i32
    %c0_i32_0 = arith.constant 0 : i32
    %c0_i32_1 = arith.constant 0 : i32
    return %c0_i32, %c0_i32_0 : i32, i32
  }
  func.func @transform_5(%arg0: i32, %arg1: i32) -> (i32, i32) {
    %c0_i32 = arith.constant 0 : i32
    %c0_i32_0 = arith.constant 0 : i32
    %c0_i32_1 = arith.constant 0 : i32
    return %c0_i32, %c0_i32_0 : i32, i32
  }
  func.func @transform_6(%arg0: i32, %arg1: i32) -> (i32, i32) {
    %c0_i32 = arith.constant 0 : i32
    %c0_i32_0 = arith.constant 0 : i32
    %c0_i32_1 = arith.constant 0 : i32
    return %c0_i32, %c0_i32_0 : i32, i32
  }
  func.func @transform_7(%arg0: i32, %arg1: i32) -> (i32, i32, i32) {
    %c0_i32 = arith.constant 0 : i32
    %c0_i32_0 = arith.constant 0 : i32
    %c0_i32_1 = arith.constant 0 : i32
    return %arg0, %c0_i32, %c0_i32_0 : i32, i32, i32
  }
}

</mosaic_0001>

<llo_original>
// kernel: custom_model_forward.1
$region0: #{custom_model_forward.1}
  #allocation0 [shape = 'u32[]', space=smem, size = 0x4, offset = 0x4, fixed_abs, tag = 'smem constant byte address 0x4 - core index']
  #allocation1 [shape = 'u32[144,128]{1,0:T(1,128)}', space=vmem, size = 0x12000, scoped, tag = 'internal scratch']
  #allocation2 [shape = 'f32[1,1408]{1,0:T(1,128)}', space=vmem, size = 0x1600, scoped, tag = 'scratch operand']
  #allocation3 [shape = 'f32[1,1]{1,0:T(1,128)S(1)}', space=vmem, size = 0x200, scoped, tag = 'scoped memory for custom_model_forward.1']
  %s0 = inlined_call_operand.vmem [shape: bf16[2,64,16], index: 0, kind: input, shape index: {}]
  %s1 = inlined_call_operand.vmem [shape: bf16[16,32], index: 1, kind: input, shape index: {}]
  %s2 = inlined_call_operand.vmem [shape: f32[1,32], index: 2, kind: input, shape index: {}]
  %s3 = inlined_call_operand.vmem [shape: bf16[32,1408], index: 3, kind: input, shape index: {}]
  %s4 = inlined_call_operand.vmem [shape: f32[1,1408], index: 4, kind: input, shape index: {}]
  %s5 = inlined_call_operand.vmem [shape: f32[1,1408], index: 5, kind: input, shape index: {}]
  %s6 = inlined_call_operand.<no memory space> [shape: f32[1,1], index: 6, kind: input, shape index: {}]
  %s7 = inlined_call_operand.vmem [shape: f32[2,1,128], index: 7, kind: output, shape index: {}]
  %s8 = sld [smem:[#allocation0]]
  $region69: #{custom_model_forward.1} parent=0
    _
  %s10 = ssub.s32 1, %s8
  %s11 = scalar_select 0, %s10, %s8
  %v12 = vstv %s6
  %13 = vst [vmem:[#allocation3] sm:$0x1] %v12
  loop: start=0, step=1, limit=4
  $region2: #{custom_model_forward.1} parent=0 // loop_pre_header
    _
  $region3: #{custom_model_forward.1} parent=0 // loop_header
    %s15 = sphi 0, %s19
    %p16 = scmp.ge.s32.totalorder %s15, 4
    %s22 = sphi 0, %s34
    %s23 = sphi 0, %s30
    %s24 = sphi 0, %s22
    %s25 = sphi 0, %s23
    %s26 = sphi 0, %s24
    %s27 = sphi 0, %s25
    %s39 = sphi 0, %s41
    %s42 = sphi 0, %s39
    %s43 = sphi 0, %s42
    %s59 = sphi 0, %s43
    %s63 = sphi 0, %s63
    %s65 = sphi 0, %s63
    %s66 = sphi 0, %s65
    %s80 = sphi 0, %s66
    %s84 = sphi 0, %s84
    %s86 = sphi 0, %s84
    %s87 = sphi 0, %s86
    %s101 = sphi 0, %s87
    %s105 = sphi 0, %s105
    %s107 = sphi 0, %s105
    %s108 = sphi 0, %s107
    %s122 = sphi 0, %s108
    %s126 = sphi 0, %s126
    %s128 = sphi 0, %s126
    %s129 = sphi 0, %s128
    %s143 = sphi 0, %s129
    %s147 = sphi 0, %s147
    %s149 = sphi 0, %s147
    %s150 = sphi 0, %s149
    %s164 = sphi 0, %s150
    %s168 = sphi 0, %s168
    %s170 = sphi 0, %s168
    %s171 = sphi 0, %s170
    %s185 = sphi 0, %s171
    %s191 = sphi 0, %s193
    %s194 = sphi 0, %s191
    %s195 = sphi 0, %s194
    %s211 = sphi 0, %s195
  $region4: #{custom_model_forward.1} parent=0 // loop_header_branch
    %18 = sbr.rel (%p16) target = $region8
  $region5: #{custom_model_forward.1} parent=0 // loop_body
    %s20 = ssub.s32 %s15, 1
    %s21 = ssub.s32 %s15, 2
    %s28 = sadd.s32 1, %s23
    %p29 = scmp.ge.s32.totalorder %s28, 1
    %s30 = scalar_select %p29, 0, %s28
    %s31 = sadd.s32 1, %s22
    %s32 = scalar_select %p29, %s31, %s22
    %p33 = scmp.ge.s32.totalorder %s32, 2
    %s34 = scalar_select %p33, 0, %s32
    %s35 = ssub.s32 %s22, %s34
    %s36 = ssub.s32 %s23, %s30
    %s37 = sor.u32 %s35, %s36
    %p38 = scmp.eq.s32.totalorder %s37, 0
    %s40 = sadd.s32 %s39, 1
    %s41 = scalar_select %p38, %s39, %s40
    %p44 = pneg %p38
    %p45 = scmp.eq.s32.totalorder %s15, 1
    %p46 = por %p44, %p45
    %p47 = scmp.ne.s32.totalorder %s39, %s42
    %p48 = scmp.eq.s32.totalorder %s15, 0
    %p49 = por %p47, %p48
    %p50 = scmp.ne.s32.totalorder %s39, %s42
    %p51 = scmp.eq.s32.totalorder %s20, 1
    %p52 = por %p50, %p51
    %p53 = scmp.ne.s32.totalorder %s42, %s43
    %p54 = scmp.eq.s32.totalorder %s20, 0
    %p55 = por %p53, %p54
    %p56 = scmp.ne.s32.totalorder %s42, %s43
    %p57 = scmp.eq.s32.totalorder %s21, 1
    %p58 = por %p56, %p57
    %p60 = scmp.ne.s32.totalorder %s43, %s59
    %p61 = scmp.eq.s32.totalorder %s21, 0
    %p62 = por %p60, %p61
    %s64 = sadd.s32 %s63, 1
    %p67 = scmp.eq.s32.totalorder %s15, 1
    %p68 = scmp.ne.s32.totalorder %s63, %s65
    %p69 = scmp.eq.s32.totalorder %s15, 0
    %p70 = por %p68, %p69
    %p71 = scmp.ne.s32.totalorder %s63, %s65
    %p72 = scmp.eq.s32.totalorder %s20, 1
    %p73 = por %p71, %p72
    %p74 = scmp.ne.s32.totalorder %s65, %s66
    %p75 = scmp.eq.s32.totalorder %s20, 0
    %p76 = por %p74, %p75
    %p77 = scmp.ne.s32.totalorder %s65, %s66
    %p78 = scmp.eq.s32.totalorder %s21, 1
    %p79 = por %p77, %p78
    %p81 = scmp.ne.s32.totalorder %s66, %s80
    %p82 = scmp.eq.s32.totalorder %s21, 0
    %p83 = por %p81, %p82
    %s85 = sadd.s32 %s84, 1
    %p88 = scmp.eq.s32.totalorder %s15, 1
    %p89 = scmp.ne.s32.totalorder %s84, %s86
    %p90 = scmp.eq.s32.totalorder %s15, 0
    %p91 = por %p89, %p90
    %p92 = scmp.ne.s32.totalorder %s84, %s86
    %p93 = scmp.eq.s32.totalorder %s20, 1
    %p94 = por %p92, %p93
    %p95 = scmp.ne.s32.totalorder %s86, %s87
    %p96 = scmp.eq.s32.totalorder %s20, 0
    %p97 = por %p95, %p96
    %p98 = scmp.ne.s32.totalorder %s86, %s87
    %p99 = scmp.eq.s32.totalorder %s21, 1
    %p100 = por %p98, %p99
    %p102 = scmp.ne.s32.totalorder %s87, %s101
    %p103 = scmp.eq.s32.totalorder %s21, 0
    %p104 = por %p102, %p103
    %s106 = sadd.s32 %s105, 1
    %p109 = scmp.eq.s32.totalorder %s15, 1
    %p110 = scmp.ne.s32.totalorder %s105, %s107
    %p111 = scmp.eq.s32.totalorder %s15, 0
    %p112 = por %p110, %p111
    %p113 = scmp.ne.s32.totalorder %s105, %s107
    %p114 = scmp.eq.s32.totalorder %s20, 1
    %p115 = por %p113, %p114
    %p116 = scmp.ne.s32.totalorder %s107, %s108
    %p117 = scmp.eq.s32.totalorder %s20, 0
    %p118 = por %p116, %p117
    %p119 = scmp.ne.s32.totalorder %s107, %s108
    %p120 = scmp.eq.s32.totalorder %s21, 1
    %p121 = por %p119, %p120
    %p123 = scmp.ne.s32.totalorder %s108, %s122
    %p124 = scmp.eq.s32.totalorder %s21, 0
    %p125 = por %p123, %p124
    %s127 = sadd.s32 %s126, 1
    %p130 = scmp.eq.s32.totalorder %s15, 1
    %p131 = scmp.ne.s32.totalorder %s126, %s128
    %p132 = scmp.eq.s32.totalorder %s15, 0
    %p133 = por %p131, %p132
    %p134 = scmp.ne.s32.totalorder %s126, %s128
    %p135 = scmp.eq.s32.totalorder %s20, 1
    %p136 = por %p134, %p135
    %p137 = scmp.ne.s32.totalorder %s128, %s129
    %p138 = scmp.eq.s32.totalorder %s20, 0
    %p139 = por %p137, %p138
    %p140 = scmp.ne.s32.totalorder %s128, %s129
    %p141 = scmp.eq.s32.totalorder %s21, 1
    %p142 = por %p140, %p141
    %p144 = scmp.ne.s32.totalorder %s129, %s143
    %p145 = scmp.eq.s32.totalorder %s21, 0
    %p146 = por %p144, %p145
    %s148 = sadd.s32 %s147, 1
    %p151 = scmp.eq.s32.totalorder %s15, 1
    %p152 = scmp.ne.s32.totalorder %s147, %s149
    %p153 = scmp.eq.s32.totalorder %s15, 0
    %p154 = por %p152, %p153
    %p155 = scmp.ne.s32.totalorder %s147, %s149
    %p156 = scmp.eq.s32.totalorder %s20, 1
    %p157 = por %p155, %p156
    %p158 = scmp.ne.s32.totalorder %s149, %s150
    %p159 = scmp.eq.s32.totalorder %s20, 0
    %p160 = por %p158, %p159
    %p161 = scmp.ne.s32.totalorder %s149, %s150
    %p162 = scmp.eq.s32.totalorder %s21, 1
    %p163 = por %p161, %p162
    %p165 = scmp.ne.s32.totalorder %s150, %s164
    %p166 = scmp.eq.s32.totalorder %s21, 0
    %p167 = por %p165, %p166
    %s169 = sadd.s32 %s168, 1
    %p172 = scmp.eq.s32.totalorder %s15, 1
    %p173 = scmp.ne.s32.totalorder %s168, %s170
    %p174 = scmp.eq.s32.totalorder %s15, 0
    %p175 = por %p173, %p174
    %p176 = scmp.ne.s32.totalorder %s168, %s170
    %p177 = scmp.eq.s32.totalorder %s20, 1
    %p178 = por %p176, %p177
    %p179 = scmp.ne.s32.totalorder %s170, %s171
    %p180 = scmp.eq.s32.totalorder %s20, 0
    %p181 = por %p179, %p180
    %p182 = scmp.ne.s32.totalorder %s170, %s171
    %p183 = scmp.eq.s32.totalorder %s21, 1
    %p184 = por %p182, %p183
    %p186 = scmp.ne.s32.totalorder %s171, %s185
    %p187 = scmp.eq.s32.totalorder %s21, 0
    %p188 = por %p186, %p187
    %s189 = ssub.s32 %s22, %s34
    %p190 = scmp.eq.s32.totalorder %s189, 0
    %s192 = sadd.s32 %s191, 1
    %s193 = scalar_select %p190, %s191, %s192
    %p196 = pneg %p190
    %p197 = scmp.eq.s32.totalorder %s15, 1
    %p198 = por %p196, %p197
    %p199 = scmp.ne.s32.totalorder %s191, %s194
    %p200 = scmp.eq.s32.totalorder %s15, 0
    %p201 = por %p199, %p200
    %p202 = scmp.ne.s32.totalorder %s191, %s194
    %p203 = scmp.eq.s32.totalorder %s20, 1
    %p204 = por %p202, %p203
    %p205 = scmp.ne.s32.totalorder %s194, %s195
    %p206 = scmp.eq.s32.totalorder %s20, 0
    %p207 = por %p205, %p206
    %p208 = scmp.ne.s32.totalorder %s194, %s195
    %p209 = scmp.eq.s32.totalorder %s21, 1
    %p210 = por %p208, %p209
    %p212 = scmp.ne.s32.totalorder %s195, %s211
    %p213 = scmp.eq.s32.totalorder %s21, 0
    %p214 = por %p212, %p213
    %p215 = scmp.le.s32.totalorder 1, %s15
    %p216 = scmp.lt.s32.totalorder %s15, 3
    %p217 = pnand %p215, %p216
    %p218 = pneg %p217
    // Predicated region
    $region9: #{custom_model_forward.1} parent=5 // pred_check
      _
    $region10: #{custom_model_forward.1} parent=5 // pred_check_branch
      %220 = sbr.rel (%p217) target = $region12
    $region11: #{custom_model_forward.1} parent=5 // pred_region
      %s221 = ssub.s32 %s15, 1
      // Predicated region
      $region13: #{custom_model_forward.1} parent=11 // pred_check
        %p222 = pneg %p76
      $region14: #{custom_model_forward.1} parent=11 // pred_check_branch
        %224 = sbr.rel (%p222) target = $region16
      $region15: #{custom_model_forward.1} parent=11 // pred_region
        _
      $region16: #{custom_model_forward.1} parent=11 // pred_fallthru
        _
      // Predicated region
      $region17: #{custom_model_forward.1} parent=11 // pred_check
        %p225 = pneg %p97
      $region18: #{custom_model_forward.1} parent=11 // pred_check_branch
        %227 = sbr.rel (%p225) target = $region20
      $region19: #{custom_model_forward.1} parent=11 // pred_region
        _
      $region20: #{custom_model_forward.1} parent=11 // pred_fallthru
        _
      // Predicated region
      $region21: #{custom_model_forward.1} parent=11 // pred_check
        %p228 = pneg %p118
      $region22: #{custom_model_forward.1} parent=11 // pred_check_branch
        %230 = sbr.rel (%p228) target = $region24
      $region23: #{custom_model_forward.1} parent=11 // pred_region
        _
      $region24: #{custom_model_forward.1} parent=11 // pred_fallthru
        _
      // Predicated region
      $region25: #{custom_model_forward.1} parent=11 // pred_check
        %p231 = pneg %p139
      $region26: #{custom_model_forward.1} parent=11 // pred_check_branch
        %233 = sbr.rel (%p231) target = $region28
      $region27: #{custom_model_forward.1} parent=11 // pred_region
        _
      $region28: #{custom_model_forward.1} parent=11 // pred_fallthru
        _
      // Predicated region
      $region29: #{custom_model_forward.1} parent=11 // pred_check
        %p234 = pneg %p160
      $region30: #{custom_model_forward.1} parent=11 // pred_check_branch
        %236 = sbr.rel (%p234) target = $region32
      $region31: #{custom_model_forward.1} parent=11 // pred_region
        _
      $region32: #{custom_model_forward.1} parent=11 // pred_fallthru
        _
      // Predicated region
      $region33: #{custom_model_forward.1} parent=11 // pred_check
        %p237 = pneg %p181
      $region34: #{custom_model_forward.1} parent=11 // pred_check_branch
        %239 = sbr.rel (%p237) target = $region36
      $region35: #{custom_model_forward.1} parent=11 // pred_region
        _
      $region36: #{custom_model_forward.1} parent=11 // pred_fallthru
        _
    $region12: #{custom_model_forward.1} parent=5 // pred_fallthru
      _
    %p240 = scmp.lt.s32.totalorder %s15, 2
    // Predicated region
    $region37: #{custom_model_forward.1} parent=5 // pred_check
      %p241 = pneg %p240
    $region38: #{custom_model_forward.1} parent=5 // pred_check_branch
      %243 = sbr.rel (%p241) target = $region40
    $region39: #{custom_model_forward.1} parent=5 // pred_region
      // Predicated region
      $region41: #{custom_model_forward.1} parent=39 // pred_check
        %p244 = pneg %p49
      $region42: #{custom_model_forward.1} parent=39 // pred_check_branch
        %246 = sbr.rel (%p244) target = $region44
      $region43: #{custom_model_forward.1} parent=39 // pred_region
        %s247 = smul.u32 8, %s23
        %p248 = scmp.lt.s32.totalorder %s22, 1
        %s249 = scalar_select %p248, %s22, 1
        %p250 = scmp.lt.s32.totalorder %s247, 7
        %s251 = scalar_select %p250, %s247, 7
        %s252 = smul.addr %s249, 8
        %s253 = sadd.s32 %s251, %s252
        %s254 = smul.addr %s253, 4
        %s255 = scalar_lea.vmem %s0, %s254
        %s256 = smul.u32 8, %s23
      $region44: #{custom_model_forward.1} parent=39 // pred_fallthru
        _
    $region40: #{custom_model_forward.1} parent=5 // pred_fallthru
      _
    %p257 = scmp.le.s32.totalorder 1, %s15
    %p258 = scmp.lt.s32.totalorder %s15, 3
    %p259 = pnand %p257, %p258
    %p260 = pneg %p259
    // Predicated region
    $region45: #{custom_model_forward.1} parent=5 // pred_check
      _
    $region46: #{custom_model_forward.1} parent=5 // pred_check_branch
      %262 = sbr.rel (%p259) target = $region48
    $region47: #{custom_model_forward.1} parent=5 // pred_region
      %s263 = ssub.s32 %s15, 1
      %s264 = smul.u32 8, %s25
      %p265 = scmp.lt.s32.totalorder %s24, 1
      %s266 = scalar_select %p265, %s24, 1
      %p267 = scmp.lt.s32.totalorder %s264, 7
      %s268 = scalar_select %p267, %s264, 7
      %s269 = smul.addr %s266, 8
      %s270 = sadd.s32 %s268, %s269
      %s271 = smul.addr %s270, 4
      %s272 = scalar_lea.vmem %s0, %s271
      %p273 = pneg %p55
      %p274 = pneg %p52
      %p275 = pneg %p76
      %p276 = pneg %p73
      %p277 = pneg %p97
      %p278 = pneg %p94
      %p279 = pneg %p118
      %p280 = pneg %p115
      %p281 = pneg %p139
      %p282 = pneg %p136
      %p283 = pneg %p160
      %p284 = pneg %p157
      %p285 = pneg %p181
      %p286 = pneg %p178
      %p287 = pneg %p207
      %p288 = pneg %p204
      %p289 = scmp.lt.s32.totalorder %s24, 1
      %s290 = scalar_select %p289, %s24, 1
      %s291 = scalar_lea.vmem %s7, %s290
      %s292 = smul.u32 8, %s25
      %p293 = scmp.lt.s32.totalorder %s24, 1
      %s294 = scalar_select %p293, %s24, 1
      %p295 = scmp.lt.s32.totalorder %s292, 7
      %s296 = scalar_select %p295, %s292, 7
      %s297 = smul.addr %s294, 8
      %s298 = sadd.s32 %s296, %s297
      %s299 = smul.addr %s298, 4
      %s300 = scalar_lea.vmem %s0, %s299
      %s301 = smul.u32 8, %s25
      %p302 = scmp.lt.s32.totalorder %s24, 1
      %s303 = scalar_select %p302, %s24, 1
      %s304 = scalar_lea.vmem %s7, %s303
      %p306 = scmp.eq.s32.totalorder %s25, 0
      // Predicated region
      $region49: #{custom_model_forward.1} parent=47 // pred_check
        %p307 = pneg %p306
      $region50: #{custom_model_forward.1} parent=47 // pred_check_branch
        %309 = sbr.rel (%p307) target = $region52
      $region51: #{custom_model_forward.1} parent=47 // pred_region
        %310 = vst [vmem:[#allocation2] sm:$0xff] 0.0
        %v311 = vlaneseq
        %vm312 = vcmp.ge.s32.totalorder %v311, 0
        %vm313 = vcmp.lt.s32.totalorder %v311, 384
        %vm314 = vmand %vm312, %vm313
        %315 = vst.msk [vmem:[#allocation2 + $0x8] sm:$0x7] %vm314, 0.0
      $region52: #{custom_model_forward.1} parent=47 // pred_fallthru
        _
      %v316 = vld [vmem:[%s300] sm:$0xf]
      %v317 = vld [vmem:[%s300 + $0x4] sm:$0xf]
      %v318 = vld [vmem:[%s300 + $0x8] sm:$0xf]
      %v319 = vld [vmem:[%s300 + $0xc] sm:$0xf]
      %v320 = vld [vmem:[%s300 + $0x10] sm:$0xf]
      %v321 = vld [vmem:[%s300 + $0x14] sm:$0xf]
      %v322 = vld [vmem:[%s300 + $0x18] sm:$0xf]
      %v323 = vld [vmem:[%s300 + $0x1c] sm:$0xf]
      %v324 = vld [vmem:[%s1] sm:$0xf]
      %v325 = vld [vmem:[%s1 + $0x4] sm:$0xf]
      %v326 = vld [vmem:[%s2] sm:$0x1]
      %v328 = vlaneseq
      %v329 = vshrl.u32 %v328, 7
      %v330 = vsub.s32 0, %v329
      %v331 = vrot.slane %v326, %v330
      %v341 = vunpack.c.l.b16 %v316
      %v342 = vunpack.c.l.b16 %v317
      %v343 = vunpack.c.l.b16 %v318
      %v344 = vunpack.c.l.b16 %v319
      %v345 = vunpack.c.l.b16 %v320
      %v346 = vunpack.c.l.b16 %v321
      %v347 = vunpack.c.l.b16 %v322
      %v348 = vunpack.c.l.b16 %v323
      %v349 = vpack.c.b16 %v342, %v341
      %v350 = vpack.c.b16 %v344, %v343
      %v351 = vpack.c.b16 %v346, %v345
      %v352 = vpack.c.b16 %v348, %v347
      %v355 = vunpack.c.l.b16 %v324
      %v356 = vunpack.c.l.b16 %v325
      %v357 = vpack.c.b16 %v356, %v355
      %vm359 = vcmask 130048
      %v361 = vsel %vm359, %v349, 0
      %v364 = vsel %vm359, %v350, 0
      %v367 = vsel %vm359, %v351, 0
      %v370 = vsel %vm359, %v352, 0
      %372 = vmatprep.subr.bf16.mxu0 0
      %373 = vmatpush1.bf16.msra.mxu0 0
      %374 = vmatprep.subr.bf16.mxu0 0
      %375 = vmatpush1.bf16.msra.mxu0 0
      %376 = vmatprep.subr.bf16.mxu0 0
      %377 = vmatpush1.bf16.msra.mxu0 0
      %378 = vmatprep.subr.bf16.mxu0 0
      %379 = vmatpush1.bf16.msra.mxu0 0
      %380 = vmatprep.subr.bf16.mxu0 0
      %381 = vmatpush1.bf16.msra.mxu0 0
      %382 = vmatprep.subr.bf16.mxu0 0
      %383 = vmatpush1.bf16.msra.mxu0 0
      %384 = vmatprep.subr.bf16.mxu0 0
      %385 = vmatpush1.bf16.msra.mxu0 0
      %386 = vmatprep.subr.bf16.mxu0 0
      %387 = vmatpush1.bf16.msra.mxu0 %v357
      %388 = vmatprep.subr.bf16.mxu0 0
      %389 = vmatpush2.bf16.msra.mxu0 0
      %390 = vmatprep.subr.bf16.mxu0 0
      %391 = vmatpush2.bf16.msra.mxu0 0
      %392 = vmatprep.subr.bf16.mxu0 0
      %393 = vmatpush2.bf16.msra.mxu0 0
      %394 = vmatprep.subr.bf16.mxu0 0
      %395 = vmatpush2.bf16.msra.mxu0 0
      %396 = vmatprep.subr.bf16.mxu0 0
      %397 = vmatpush2.bf16.msra.mxu0 0
      %398 = vmatprep.subr.bf16.mxu0 0
      %399 = vmatpush2.bf16.msra.mxu0 0
      %400 = vmatprep.subr.bf16.mxu0 0
      %401 = vmatpush2.bf16.msra.mxu0 0
      %402 = vmatprep.subr.bf16.mxu0 0
      %403 = vmatpush2.bf16.msra.mxu0 0
      %404 = vmatprep.mubr.bf16.mxu0 0
      %405 = vmatmul.mubr.bf16.gmra.mxu0 %v361
      %v406 = vpop.f32.mrf.mxu0
      %v407 = vadd.f32 %v331, %v406
      %v408 = vpop.f32.mrf.mxu0
      %v409 = vpop.f32.mrf.mxu0
      %v410 = vadd.f32 %v331, %v409
      %v411 = vpop.f32.mrf.mxu0
      %412 = vmatprep.mubr.bf16.mxu0 0
      %413 = vmatmul.mubr.bf16.gmra.mxu0 %v364
      %v414 = vpop.f32.mrf.mxu0
      %v415 = vadd.f32 %v331, %v414
      %v416 = vpop.f32.mrf.mxu0
      %v417 = vpop.f32.mrf.mxu0
      %v418 = vadd.f32 %v331, %v417
      %v419 = vpop.f32.mrf.mxu0
      %420 = vmatprep.mubr.bf16.mxu0 0
      %421 = vmatmul.mubr.bf16.gmra.mxu0 %v367
      %v422 = vpop.f32.mrf.mxu0
      %v423 = vadd.f32 %v331, %v422
      %v424 = vpop.f32.mrf.mxu0
      %v425 = vpop.f32.mrf.mxu0
      %v426 = vadd.f32 %v331, %v425
      %v427 = vpop.f32.mrf.mxu0
      %428 = vmatprep.mubr.bf16.mxu0 0
      %429 = vmatmul.mubr.bf16.gmra.mxu0 %v370
      %v430 = vpop.f32.mrf.mxu0
      %v431 = vadd.f32 %v331, %v430
      %v432 = vpop.f32.mrf.mxu0
      %v433 = vpop.f32.mrf.mxu0
      %v434 = vadd.f32 %v331, %v433
      %v435 = vpop.f32.mrf.mxu0
      %436 = vdwg.mxu0
      %v437 = vxor.u32 %v407, 2147483648
      %v438 = vxor.u32 %v410, 2147483648
      %v439 = vxor.u32 %v415, 2147483648
      %v440 = vxor.u32 %v418, 2147483648
      %v441 = vxor.u32 %v423, 2147483648
      %v442 = vxor.u32 %v426, 2147483648
      %v443 = vxor.u32 %v431, 2147483648
      %v444 = vxor.u32 %v434, 2147483648
      %v445 = vmul.f32 %v437, 1.442695
      %v446 = vpow.pop %v445
      %v447 = vmul.f32 %v438, 1.442695
      %v448 = vpow.pop %v447
      %v449 = vmul.f32 %v439, 1.442695
      %v450 = vpow.pop %v449
      %v451 = vmul.f32 %v440, 1.442695
      %v452 = vpow.pop %v451
      %v453 = vmul.f32 %v441, 1.442695
      %v454 = vpow.pop %v453
      %v455 = vmul.f32 %v442, 1.442695
      %v456 = vpow.pop %v455
      %v457 = vmul.f32 %v443, 1.442695
      %v458 = vpow.pop %v457
      %v459 = vmul.f32 %v444, 1.442695
      %v460 = vpow.pop %v459
      %v461 = vadd.f32 %v446, 1.0
      %v462 = vadd.f32 %v448, 1.0
      %v463 = vadd.f32 %v450, 1.0
      %v464 = vadd.f32 %v452, 1.0
      %v465 = vadd.f32 %v454, 1.0
      %v466 = vadd.f32 %v456, 1.0
      %v467 = vadd.f32 %v458, 1.0
      %v468 = vadd.f32 %v460, 1.0
      %v469 = vrcp.pop %v461
      %v470 = vmul.f32 1.0, %v469
      %v471 = vrcp.pop %v462
      %v472 = vmul.f32 1.0, %v471
      %v473 = vrcp.pop %v463
      %v474 = vmul.f32 1.0, %v473
      %v475 = vrcp.pop %v464
      %v476 = vmul.f32 1.0, %v475
      %v477 = vrcp.pop %v465
      %v478 = vmul.f32 1.0, %v477
      %v479 = vrcp.pop %v466
      %v480 = vmul.f32 1.0, %v479
      %v481 = vrcp.pop %v467
      %v482 = vmul.f32 1.0, %v481
      %v483 = vrcp.pop %v468
      %v484 = vmul.f32 1.0, %v483
      %v485 = vmul.f32 %v407, %v470
      %v486 = vmul.f32 %v410, %v472
      %v487 = vmul.f32 %v415, %v474
      %v488 = vmul.f32 %v418, %v476
      %v489 = vmul.f32 %v423, %v478
      %v490 = vmul.f32 %v426, %v480
      %v491 = vmul.f32 %v431, %v482
      %v492 = vmul.f32 %v434, %v484
      %v493 = vpack.c.bf16 %v486, %v485
      %v494 = vpack.c.bf16 %v488, %v487
      %v495 = vpack.c.bf16 %v490, %v489
      %v496 = vpack.c.bf16 %v492, %v491
      %v497 = vld [vmem:[%s3] sm:$0xff]
      %v498 = vld [vmem:[%s3 + $0x8] sm:$0xff]
      %v499 = vld [vmem:[%s3 + $0x10] sm:$0xff]
      %v500 = vld [vmem:[%s3 + $0x18] sm:$0xff]
      %v501 = vld [vmem:[%s3 + $0x20] sm:$0xff]
      %v502 = vld [vmem:[%s3 + $0x28] sm:$0xf]
      %v503 = vld [vmem:[%s3 + $0x2c] sm:$0xff]
      %v504 = vld [vmem:[%s3 + $0x34] sm:$0xff]
      %v505 = vld [vmem:[%s3 + $0x3c] sm:$0xff]
      %v506 = vld [vmem:[%s3 + $0x44] sm:$0xff]
      %v507 = vld [vmem:[%s3 + $0x4c] sm:$0xff]
      %v508 = vld [vmem:[%s3 + $0x54] sm:$0xf]
      %v509 = vld [vmem:[%s3 + $0x58] sm:$0xff]
      %v510 = vld [vmem:[%s3 + $0x60] sm:$0xff]
      %v511 = vld [vmem:[%s3 + $0x68] sm:$0xff]
      %v512 = vld [vmem:[%s3 + $0x70] sm:$0xff]
      %v513 = vld [vmem:[%s3 + $0x78] sm:$0xff]
      %v514 = vld [vmem:[%s3 + $0x80] sm:$0xf]
      %v515 = vld [vmem:[%s3 + $0x84] sm:$0xff]
      %v516 = vld [vmem:[%s3 + $0x8c] sm:$0xff]
      %v517 = vld [vmem:[%s3 + $0x94] sm:$0xff]
      %v518 = vld [vmem:[%s3 + $0x9c] sm:$0xff]
      %v519 = vld [vmem:[%s3 + $0xa4] sm:$0xff]
      %v520 = vld [vmem:[%s3 + $0xac] sm:$0xf]
      %v521 = vld [vmem:[%s4] sm:$0xff]
      %v522 = vld [vmem:[%s4 + $0x8] sm:$0x7]
      %v525 = vlaneseq
      %v526 = vshrl.u32 %v525, 7
      %v527 = vsub.s32 0, %v526
      %v528 = vrot.slane %v521, %v527
      %v529 = vlaneseq
      %v530 = vshrl.u32 %v529, 7
      %v531 = vsub.s32 1, %v530
      %v532 = vrot.slane %v521, %v531
      %v533 = vlaneseq
      %v534 = vshrl.u32 %v533, 7
      %v535 = vsub.s32 2, %v534
      %v536 = vrot.slane %v521, %v535
      %v537 = vlaneseq
      %v538 = vshrl.u32 %v537, 7
      %v539 = vsub.s32 3, %v538
      %v540 = vrot.slane %v521, %v539
      %v541 = vlaneseq
      %v542 = vshrl.u32 %v541, 7
      %v543 = vsub.s32 4, %v542
      %v544 = vrot.slane %v521, %v543
      %v545 = vlaneseq
      %v546 = vshrl.u32 %v545, 7
      %v547 = vsub.s32 5, %v546
      %v548 = vrot.slane %v521, %v547
      %v549 = vlaneseq
      %v550 = vshrl.u32 %v549, 7
      %v551 = vsub.s32 6, %v550
      %v552 = vrot.slane %v521, %v551
      %v553 = vlaneseq
      %v554 = vshrl.u32 %v553, 7
      %v555 = vsub.s32 7, %v554
      %v556 = vrot.slane %v521, %v555
      %v557 = vlaneseq
      %v558 = vshrl.u32 %v557, 7
      %v559 = vsub.s32 0, %v558
      %v560 = vrot.slane %v522, %v559
      %v561 = vlaneseq
      %v562 = vshrl.u32 %v561, 7
      %v563 = vsub.s32 1, %v562
      %v564 = vrot.slane %v522, %v563
      %v565 = vlaneseq
      %v566 = vshrl.u32 %v565, 7
      %v567 = vsub.s32 2, %v566
      %v568 = vrot.slane %v522, %v567
      %v604 = vunpack.c.l.b16 %v497
      %v605 = vunpack.c.h.b16 %v497
      %v606 = vunpack.c.l.b16 %v498
      %v607 = vunpack.c.h.b16 %v498
      %v608 = vunpack.c.l.b16 %v499
      %v609 = vunpack.c.h.b16 %v499
      %v610 = vunpack.c.l.b16 %v500
      %v611 = vunpack.c.h.b16 %v500
      %v612 = vunpack.c.l.b16 %v501
      %v613 = vunpack.c.h.b16 %v501
      %v614 = vunpack.c.l.b16 %v502
      %v615 = vunpack.c.l.b16 %v503
      %v616 = vunpack.c.h.b16 %v503
      %v617 = vunpack.c.l.b16 %v504
      %v618 = vunpack.c.h.b16 %v504
      %v619 = vunpack.c.l.b16 %v505
      %v620 = vunpack.c.h.b16 %v505
      %v621 = vunpack.c.l.b16 %v506
      %v622 = vunpack.c.h.b16 %v506
      %v623 = vunpack.c.l.b16 %v507
      %v624 = vunpack.c.h.b16 %v507
      %v625 = vunpack.c.l.b16 %v508
      %v626 = vunpack.c.l.b16 %v509
      %v627 = vunpack.c.h.b16 %v509
      %v628 = vunpack.c.l.b16 %v510
      %v629 = vunpack.c.h.b16 %v510
      %v630 = vunpack.c.l.b16 %v511
      %v631 = vunpack.c.h.b16 %v511
      %v632 = vunpack.c.l.b16 %v512
      %v633 = vunpack.c.h.b16 %v512
      %v634 = vunpack.c.l.b16 %v513
      %v635 = vunpack.c.h.b16 %v513
      %v636 = vunpack.c.l.b16 %v514
      %v637 = vunpack.c.l.b16 %v515
      %v638 = vunpack.c.h.b16 %v515
      %v639 = vunpack.c.l.b16 %v516
      %v640 = vunpack.c.h.b16 %v516
      %v641 = vunpack.c.l.b16 %v517
      %v642 = vunpack.c.h.b16 %v517
      %v643 = vunpack.c.l.b16 %v518
      %v644 = vunpack.c.h.b16 %v518
      %v645 = vunpack.c.l.b16 %v519
      %v646 = vunpack.c.h.b16 %v519
      %v647 = vunpack.c.l.b16 %v520
      %v648 = vpack.c.b16 %v615, %v604
      %v649 = vpack.c.b16 %v616, %v605
      %v650 = vpack.c.b16 %v617, %v606
      %v651 = vpack.c.b16 %v618, %v607
      %v652 = vpack.c.b16 %v619, %v608
      %v653 = vpack.c.b16 %v620, %v609
      %v654 = vpack.c.b16 %v621, %v610
      %v655 = vpack.c.b16 %v622, %v611
      %v656 = vpack.c.b16 %v623, %v612
      %v657 = vpack.c.b16 %v624, %v613
      %v658 = vpack.c.b16 %v625, %v614
      %v659 = vpack.c.b16 %v637, %v626
      %v660 = vpack.c.b16 %v638, %v627
      %v661 = vpack.c.b16 %v639, %v628
      %v662 = vpack.c.b16 %v640, %v629
      %v663 = vpack.c.b16 %v641, %v630
      %v664 = vpack.c.b16 %v642, %v631
      %v665 = vpack.c.b16 %v643, %v632
      %v666 = vpack.c.b16 %v644, %v633
      %v667 = vpack.c.b16 %v645, %v634
      %v668 = vpack.c.b16 %v646, %v635
      %v669 = vpack.c.b16 %v647, %v636
      %vm692 = vcmask 261120
      %v694 = vsel %vm692, %v493, 0
      %v697 = vsel %vm692, %v494, 0
      %v700 = vsel %vm692, %v495, 0
      %v703 = vsel %vm692, %v496, 0
      %705 = vmatprep.subr.bf16.mxu0 0
      %706 = vmatpush1.bf16.msra.mxu0 0
      %707 = vmatprep.subr.bf16.mxu0 0
      %708 = vmatpush1.bf16.msra.mxu0 0
      %709 = vmatprep.subr.bf16.mxu0 0
      %710 = vmatpush1.bf16.msra.mxu0 0
      %711 = vmatprep.subr.bf16.mxu0 0
      %712 = vmatpush1.bf16.msra.mxu0 0
      %713 = vmatprep.subr.bf16.mxu0 0
      %714 = vmatpush1.bf16.msra.mxu0 0
      %715 = vmatprep.subr.bf16.mxu0 0
      %716 = vmatpush1.bf16.msra.mxu0 0
      %717 = vmatprep.subr.bf16.mxu0 %v660
      %718 = vmatpush1.bf16.msra.mxu0 %v659
      %719 = vmatprep.subr.bf16.mxu0 %v649
      %720 = vmatpush1.bf16.msra.mxu0 %v648
      %721 = vmatprep.subr.bf16.mxu0 0
      %722 = vmatpush2.bf16.msra.mxu0 0
      %723 = vmatprep.subr.bf16.mxu0 0
      %724 = vmatpush2.bf16.msra.mxu0 0
      %725 = vmatprep.subr.bf16.mxu0 0
      %726 = vmatpush2.bf16.msra.mxu0 0
      %727 = vmatprep.subr.bf16.mxu0 0
      %728 = vmatpush2.bf16.msra.mxu0 0
      %729 = vmatprep.subr.bf16.mxu0 0
      %730 = vmatpush2.bf16.msra.mxu0 0
      %731 = vmatprep.subr.bf16.mxu0 0
      %732 = vmatpush2.bf16.msra.mxu0 0
      %733 = vmatprep.subr.bf16.mxu0 0
      %734 = vmatpush2.bf16.msra.mxu0 0
      %735 = vmatprep.subr.bf16.mxu0 0
      %736 = vmatpush2.bf16.msra.mxu0 0
      %737 = vmatprep.mubr.bf16.mxu0 0
      %738 = vmatmul.mubr.bf16.gmra.mxu0 %v694
      %v739 = vpop.f32.mrf.mxu0
      %v740 = vadd.f32 %v528, %v739
      %v741 = vpop.f32.mrf.mxu0
      %v742 = vadd.f32 %v532, %v741
      %v743 = vpop.f32.mrf.mxu0
      %v744 = vadd.f32 %v528, %v743
      %v745 = vpop.f32.mrf.mxu0
      %v746 = vadd.f32 %v532, %v745
      %747 = vmatprep.mubr.bf16.mxu0 0
      %748 = vmatmul.mubr.bf16.gmra.mxu0 %v697
      %v749 = vpop.f32.mrf.mxu0
      %v750 = vadd.f32 %v528, %v749
      %v751 = vpop.f32.mrf.mxu0
      %v752 = vadd.f32 %v532, %v751
      %v753 = vpop.f32.mrf.mxu0
      %v754 = vadd.f32 %v528, %v753
      %v755 = vpop.f32.mrf.mxu0
      %v756 = vadd.f32 %v532, %v755
      %757 = vmatprep.mubr.bf16.mxu0 0
      %758 = vmatmul.mubr.bf16.gmra.mxu0 %v700
      %v759 = vpop.f32.mrf.mxu0
      %v760 = vadd.f32 %v528, %v759
      %v761 = vpop.f32.mrf.mxu0
      %v762 = vadd.f32 %v532, %v761
      %v763 = vpop.f32.mrf.mxu0
      %v764 = vadd.f32 %v528, %v763
      %v765 = vpop.f32.mrf.mxu0
      %v766 = vadd.f32 %v532, %v765
      %767 = vmatprep.mubr.bf16.mxu0 0
      %768 = vmatmul.mubr.bf16.gmra.mxu0 %v703
      %v769 = vpop.f32.mrf.mxu0
      %v770 = vadd.f32 %v528, %v769
      %v771 = vpop.f32.mrf.mxu0
      %v772 = vadd.f32 %v532, %v771
      %v773 = vpop.f32.mrf.mxu0
      %v774 = vadd.f32 %v528, %v773
      %v775 = vpop.f32.mrf.mxu0
      %v776 = vadd.f32 %v532, %v775
      %777 = vdwg.mxu0
      %778 = vmatprep.subr.bf16.mxu0 0
      %779 = vmatpush1.bf16.msra.mxu0 0
      %780 = vmatprep.subr.bf16.mxu0 0
      %781 = vmatpush1.bf16.msra.mxu0 0
      %782 = vmatprep.subr.bf16.mxu0 0
      %783 = vmatpush1.bf16.msra.mxu0 0
      %784 = vmatprep.subr.bf16.mxu0 0
      %785 = vmatpush1.bf16.msra.mxu0 0
      %786 = vmatprep.subr.bf16.mxu0 0
      %787 = vmatpush1.bf16.msra.mxu0 0
      %788 = vmatprep.subr.bf16.mxu0 0
      %789 = vmatpush1.bf16.msra.mxu0 0
      %790 = vmatprep.subr.bf16.mxu0 %v662
      %791 = vmatpush1.bf16.msra.mxu0 %v661
      %792 = vmatprep.subr.bf16.mxu0 %v651
      %793 = vmatpush1.bf16.msra.mxu0 %v650
      %794 = vmatprep.subr.bf16.mxu0 0
      %795 = vmatpush2.bf16.msra.mxu0 0
      %796 = vmatprep.subr.bf16.mxu0 0
      %797 = vmatpush2.bf16.msra.mxu0 0
      %798 = vmatprep.subr.bf16.mxu0 0
      %799 = vmatpush2.bf16.msra.mxu0 0
      %800 = vmatprep.subr.bf16.mxu0 0
      %801 = vmatpush2.bf16.msra.mxu0 0
      %802 = vmatprep.subr.bf16.mxu0 0
      %803 = vmatpush2.bf16.msra.mxu0 0
      %804 = vmatprep.subr.bf16.mxu0 0
      %805 = vmatpush2.bf16.msra.mxu0 0
      %806 = vmatprep.subr.bf16.mxu0 0
      %807 = vmatpush2.bf16.msra.mxu0 0
      %808 = vmatprep.subr.bf16.mxu0 0
      %809 = vmatpush2.bf16.msra.mxu0 0
      %810 = vmatprep.mubr.bf16.mxu0 0
      %811 = vmatmul.mubr.bf16.gmra.mxu0 %v694
      %v812 = vpop.f32.mrf.mxu0
      %v813 = vadd.f32 %v536, %v812
      %v814 = vpop.f32.mrf.mxu0
      %v815 = vadd.f32 %v540, %v814
      %v816 = vpop.f32.mrf.mxu0
      %v817 = vadd.f32 %v536, %v816
      %v818 = vpop.f32.mrf.mxu0
      %v819 = vadd.f32 %v540, %v818
      %820 = vmatprep.mubr.bf16.mxu0 0
      %821 = vmatmul.mubr.bf16.gmra.mxu0 %v697
      %v822 = vpop.f32.mrf.mxu0
      %v823 = vadd.f32 %v536, %v822
      %v824 = vpop.f32.mrf.mxu0
      %v825 = vadd.f32 %v540, %v824
      %v826 = vpop.f32.mrf.mxu0
      %v827 = vadd.f32 %v536, %v826
      %v828 = vpop.f32.mrf.mxu0
      %v829 = vadd.f32 %v540, %v828
      %830 = vmatprep.mubr.bf16.mxu0 0
      %831 = vmatmul.mubr.bf16.gmra.mxu0 %v700
      %v832 = vpop.f32.mrf.mxu0
      %v833 = vadd.f32 %v536, %v832
      %v834 = vpop.f32.mrf.mxu0
      %v835 = vadd.f32 %v540, %v834
      %v836 = vpop.f32.mrf.mxu0
      %v837 = vadd.f32 %v536, %v836
      %v838 = vpop.f32.mrf.mxu0
      %v839 = vadd.f32 %v540, %v838
      %840 = vmatprep.mubr.bf16.mxu0 0
      %841 = vmatmul.mubr.bf16.gmra.mxu0 %v703
      %v842 = vpop.f32.mrf.mxu0
      %v843 = vadd.f32 %v536, %v842
      %v844 = vpop.f32.mrf.mxu0
      %v845 = vadd.f32 %v540, %v844
      %v846 = vpop.f32.mrf.mxu0
      %v847 = vadd.f32 %v536, %v846
      %v848 = vpop.f32.mrf.mxu0
      %v849 = vadd.f32 %v540, %v848
      %850 = vdwg.mxu0
      %851 = vmatprep.subr.bf16.mxu0 0
      %852 = vmatpush1.bf16.msra.mxu0 0
      %853 = vmatprep.subr.bf16.mxu0 0
      %854 = vmatpush1.bf16.msra.mxu0 0
      %855 = vmatprep.subr.bf16.mxu0 0
      %856 = vmatpush1.bf16.msra.mxu0 0
      %857 = vmatprep.subr.bf16.mxu0 0
      %858 = vmatpush1.bf16.msra.mxu0 0
      %859 = vmatprep.subr.bf16.mxu0 0
      %860 = vmatpush1.bf16.msra.mxu0 0
      %861 = vmatprep.subr.bf16.mxu0 0
      %862 = vmatpush1.bf16.msra.mxu0 0
      %863 = vmatprep.subr.bf16.mxu0 %v664
      %864 = vmatpush1.bf16.msra.mxu0 %v663
      %865 = vmatprep.subr.bf16.mxu0 %v653
      %866 = vmatpush1.bf16.msra.mxu0 %v652
      %867 = vmatprep.subr.bf16.mxu0 0
      %868 = vmatpush2.bf16.msra.mxu0 0
      %869 = vmatprep.subr.bf16.mxu0 0
      %870 = vmatpush2.bf16.msra.mxu0 0
      %871 = vmatprep.subr.bf16.mxu0 0
      %872 = vmatpush2.bf16.msra.mxu0 0
      %873 = vmatprep.subr.bf16.mxu0 0
      %874 = vmatpush2.bf16.msra.mxu0 0
      %875 = vmatprep.subr.bf16.mxu0 0
      %876 = vmatpush2.bf16.msra.mxu0 0
      %877 = vmatprep.subr.bf16.mxu0 0
      %878 = vmatpush2.bf16.msra.mxu0 0
      %879 = vmatprep.subr.bf16.mxu0 0
      %880 = vmatpush2.bf16.msra.mxu0 0
      %881 = vmatprep.subr.bf16.mxu0 0
      %882 = vmatpush2.bf16.msra.mxu0 0
      %883 = vmatprep.mubr.bf16.mxu0 0
      %884 = vmatmul.mubr.bf16.gmra.mxu0 %v694
      %v885 = vpop.f32.mrf.mxu0
      %v886 = vadd.f32 %v544, %v885
      %v887 = vpop.f32.mrf.mxu0
      %v888 = vadd.f32 %v548, %v887
      %v889 = vpop.f32.mrf.mxu0
      %v890 = vadd.f32 %v544, %v889
      %v891 = vpop.f32.mrf.mxu0
      %v892 = vadd.f32 %v548, %v891
      %893 = vmatprep.mubr.bf16.mxu0 0
      %894 = vmatmul.mubr.bf16.gmra.mxu0 %v697
      %v895 = vpop.f32.mrf.mxu0
      %v896 = vadd.f32 %v544, %v895
      %v897 = vpop.f32.mrf.mxu0
      %v898 = vadd.f32 %v548, %v897
      %v899 = vpop.f32.mrf.mxu0
      %v900 = vadd.f32 %v544, %v899
      %v901 = vpop.f32.mrf.mxu0
      %v902 = vadd.f32 %v548, %v901
      %903 = vmatprep.mubr.bf16.mxu0 0
      %904 = vmatmul.mubr.bf16.gmra.mxu0 %v700
      %v905 = vpop.f32.mrf.mxu0
      %v906 = vadd.f32 %v544, %v905
      %v907 = vpop.f32.mrf.mxu0
      %v908 = vadd.f32 %v548, %v907
      %v909 = vpop.f32.mrf.mxu0
      %v910 = vadd.f32 %v544, %v909
      %v911 = vpop.f32.mrf.mxu0
      %v912 = vadd.f32 %v548, %v911
      %913 = vmatprep.mubr.bf16.mxu0 0
      %914 = vmatmul.mubr.bf16.gmra.mxu0 %v703
      %v915 = vpop.f32.mrf.mxu0
      %v916 = vadd.f32 %v544, %v915
      %v917 = vpop.f32.mrf.mxu0
      %v918 = vadd.f32 %v548, %v917
      %v919 = vpop.f32.mrf.mxu0
      %v920 = vadd.f32 %v544, %v919
      %v921 = vpop.f32.mrf.mxu0
      %v922 = vadd.f32 %v548, %v921
      %923 = vdwg.mxu0
      %924 = vmatprep.subr.bf16.mxu0 0
      %925 = vmatpush1.bf16.msra.mxu0 0
      %926 = vmatprep.subr.bf16.mxu0 0
      %927 = vmatpush1.bf16.msra.mxu0 0
      %928 = vmatprep.subr.bf16.mxu0 0
      %929 = vmatpush1.bf16.msra.mxu0 0
      %930 = vmatprep.subr.bf16.mxu0 0
      %931 = vmatpush1.bf16.msra.mxu0 0
      %932 = vmatprep.subr.bf16.mxu0 0
      %933 = vmatpush1.bf16.msra.mxu0 0
      %934 = vmatprep.subr.bf16.mxu0 0
      %935 = vmatpush1.bf16.msra.mxu0 0
      %936 = vmatprep.subr.bf16.mxu0 %v666
      %937 = vmatpush1.bf16.msra.mxu0 %v665
      %938 = vmatprep.subr.bf16.mxu0 %v655
      %939 = vmatpush1.bf16.msra.mxu0 %v654
      %940 = vmatprep.subr.bf16.mxu0 0
      %941 = vmatpush2.bf16.msra.mxu0 0
      %942 = vmatprep.subr.bf16.mxu0 0
      %943 = vmatpush2.bf16.msra.mxu0 0
      %944 = vmatprep.subr.bf16.mxu0 0
      %945 = vmatpush2.bf16.msra.mxu0 0
      %946 = vmatprep.subr.bf16.mxu0 0
      %947 = vmatpush2.bf16.msra.mxu0 0
      %948 = vmatprep.subr.bf16.mxu0 0
      %949 = vmatpush2.bf16.msra.mxu0 0
      %950 = vmatprep.subr.bf16.mxu0 0
      %951 = vmatpush2.bf16.msra.mxu0 0
      %952 = vmatprep.subr.bf16.mxu0 0
      %953 = vmatpush2.bf16.msra.mxu0 0
      %954 = vmatprep.subr.bf16.mxu0 0
      %955 = vmatpush2.bf16.msra.mxu0 0
      %956 = vmatprep.mubr.bf16.mxu0 0
      %957 = vmatmul.mubr.bf16.gmra.mxu0 %v694
      %v958 = vpop.f32.mrf.mxu0
      %v959 = vadd.f32 %v552, %v958
      %v960 = vpop.f32.mrf.mxu0
      %v961 = vadd.f32 %v556, %v960
      %v962 = vpop.f32.mrf.mxu0
      %v963 = vadd.f32 %v552, %v962
      %v964 = vpop.f32.mrf.mxu0
      %v965 = vadd.f32 %v556, %v964
      %966 = vmatprep.mubr.bf16.mxu0 0
      %967 = vmatmul.mubr.bf16.gmra.mxu0 %v697
      %v968 = vpop.f32.mrf.mxu0
      %v969 = vadd.f32 %v552, %v968
      %v970 = vpop.f32.mrf.mxu0
      %v971 = vadd.f32 %v556, %v970
      %v972 = vpop.f32.mrf.mxu0
      %v973 = vadd.f32 %v552, %v972
      %v974 = vpop.f32.mrf.mxu0
      %v975 = vadd.f32 %v556, %v974
      %976 = vmatprep.mubr.bf16.mxu0 0
      %977 = vmatmul.mubr.bf16.gmra.mxu0 %v700
      %v978 = vpop.f32.mrf.mxu0
      %v979 = vadd.f32 %v552, %v978
      %v980 = vpop.f32.mrf.mxu0
      %v981 = vadd.f32 %v556, %v980
      %v982 = vpop.f32.mrf.mxu0
      %v983 = vadd.f32 %v552, %v982
      %v984 = vpop.f32.mrf.mxu0
      %v985 = vadd.f32 %v556, %v984
      %986 = vmatprep.mubr.bf16.mxu0 0
      %987 = vmatmul.mubr.bf16.gmra.mxu0 %v703
      %v988 = vpop.f32.mrf.mxu0
      %v989 = vadd.f32 %v552, %v988
      %v990 = vpop.f32.mrf.mxu0
      %v991 = vadd.f32 %v556, %v990
      %v992 = vpop.f32.mrf.mxu0
      %v993 = vadd.f32 %v552, %v992
      %v994 = vpop.f32.mrf.mxu0
      %v995 = vadd.f32 %v556, %v994
      %996 = vdwg.mxu0
      %997 = vmatprep.subr.bf16.mxu0 0
      %998 = vmatpush1.bf16.msra.mxu0 0
      %999 = vmatprep.subr.bf16.mxu0 0
      %1000 = vmatpush1.bf16.msra.mxu0 0
      %1001 = vmatprep.subr.bf16.mxu0 0
      %1002 = vmatpush1.bf16.msra.mxu0 0
      %1003 = vmatprep.subr.bf16.mxu0 0
      %1004 = vmatpush1.bf16.msra.mxu0 0
      %1005 = vmatprep.subr.bf16.mxu0 0
      %1006 = vmatpush1.bf16.msra.mxu0 0
      %1007 = vmatprep.subr.bf16.mxu0 0
      %1008 = vmatpush1.bf16.msra.mxu0 0
      %1009 = vmatprep.subr.bf16.mxu0 %v668
      %1010 = vmatpush1.bf16.msra.mxu0 %v667
      %1011 = vmatprep.subr.bf16.mxu0 %v657
      %1012 = vmatpush1.bf16.msra.mxu0 %v656
      %1013 = vmatprep.subr.bf16.mxu0 0
      %1014 = vmatpush2.bf16.msra.mxu0 0
      %1015 = vmatprep.subr.bf16.mxu0 0
      %1016 = vmatpush2.bf16.msra.mxu0 0
      %1017 = vmatprep.subr.bf16.mxu0 0
      %1018 = vmatpush2.bf16.msra.mxu0 0
      %1019 = vmatprep.subr.bf16.mxu0 0
      %1020 = vmatpush2.bf16.msra.mxu0 0
      %1021 = vmatprep.subr.bf16.mxu0 0
      %1022 = vmatpush2.bf16.msra.mxu0 0
      %1023 = vmatprep.subr.bf16.mxu0 0
      %1024 = vmatpush2.bf16.msra.mxu0 0
      %1025 = vmatprep.subr.bf16.mxu0 0
      %1026 = vmatpush2.bf16.msra.mxu0 0
      %1027 = vmatprep.subr.bf16.mxu0 0
      %1028 = vmatpush2.bf16.msra.mxu0 0
      %1029 = vmatprep.mubr.bf16.mxu0 0
      %1030 = vmatmul.mubr.bf16.gmra.mxu0 %v694
      %v1031 = vpop.f32.mrf.mxu0
      %v1032 = vadd.f32 %v560, %v1031
      %v1033 = vpop.f32.mrf.mxu0
      %v1034 = vadd.f32 %v564, %v1033
      %v1035 = vpop.f32.mrf.mxu0
      %v1036 = vadd.f32 %v560, %v1035
      %v1037 = vpop.f32.mrf.mxu0
      %v1038 = vadd.f32 %v564, %v1037
      %1039 = vmatprep.mubr.bf16.mxu0 0
      %1040 = vmatmul.mubr.bf16.gmra.mxu0 %v697
      %v1041 = vpop.f32.mrf.mxu0
      %v1042 = vadd.f32 %v560, %v1041
      %v1043 = vpop.f32.mrf.mxu0
      %v1044 = vadd.f32 %v564, %v1043
      %v1045 = vpop.f32.mrf.mxu0
      %v1046 = vadd.f32 %v560, %v1045
      %v1047 = vpop.f32.mrf.mxu0
      %v1048 = vadd.f32 %v564, %v1047
      %1049 = vmatprep.mubr.bf16.mxu0 0
      %1050 = vmatmul.mubr.bf16.gmra.mxu0 %v700
      %v1051 = vpop.f32.mrf.mxu0
      %v1052 = vadd.f32 %v560, %v1051
      %v1053 = vpop.f32.mrf.mxu0
      %v1054 = vadd.f32 %v564, %v1053
      %v1055 = vpop.f32.mrf.mxu0
      %v1056 = vadd.f32 %v560, %v1055
      %v1057 = vpop.f32.mrf.mxu0
      %v1058 = vadd.f32 %v564, %v1057
      %1059 = vmatprep.mubr.bf16.mxu0 0
      %1060 = vmatmul.mubr.bf16.gmra.mxu0 %v703
      %v1061 = vpop.f32.mrf.mxu0
      %v1062 = vadd.f32 %v560, %v1061
      %v1063 = vpop.f32.mrf.mxu0
      %v1064 = vadd.f32 %v564, %v1063
      %v1065 = vpop.f32.mrf.mxu0
      %v1066 = vadd.f32 %v560, %v1065
      %v1067 = vpop.f32.mrf.mxu0
      %v1068 = vadd.f32 %v564, %v1067
      %1069 = vdwg.mxu0
      %1070 = vmatprep.subr.bf16.mxu0 0
      %1071 = vmatpush1.bf16.msra.mxu0 0
      %1072 = vmatprep.subr.bf16.mxu0 0
      %1073 = vmatpush1.bf16.msra.mxu0 0
      %1074 = vmatprep.subr.bf16.mxu0 0
      %1075 = vmatpush1.bf16.msra.mxu0 0
      %1076 = vmatprep.subr.bf16.mxu0 0
      %1077 = vmatpush1.bf16.msra.mxu0 0
      %1078 = vmatprep.subr.bf16.mxu0 0
      %1079 = vmatpush1.bf16.msra.mxu0 0
      %1080 = vmatprep.subr.bf16.mxu0 0
      %1081 = vmatpush1.bf16.msra.mxu0 0
      %1082 = vmatprep.subr.bf16.mxu0 0
      %1083 = vmatpush1.bf16.msra.mxu0 %v669
      %1084 = vmatprep.subr.bf16.mxu0 0
      %1085 = vmatpush1.bf16.msra.mxu0 %v658
      %1086 = vmatprep.subr.bf16.mxu0 0
      %1087 = vmatpush2.bf16.msra.mxu0 0
      %1088 = vmatprep.subr.bf16.mxu0 0
      %1089 = vmatpush2.bf16.msra.mxu0 0
      %1090 = vmatprep.subr.bf16.mxu0 0
      %1091 = vmatpush2.bf16.msra.mxu0 0
      %1092 = vmatprep.subr.bf16.mxu0 0
      %1093 = vmatpush2.bf16.msra.mxu0 0
      %1094 = vmatprep.subr.bf16.mxu0 0
      %1095 = vmatpush2.bf16.msra.mxu0 0
      %1096 = vmatprep.subr.bf16.mxu0 0
      %1097 = vmatpush2.bf16.msra.mxu0 0
      %1098 = vmatprep.subr.bf16.mxu0 0
      %1099 = vmatpush2.bf16.msra.mxu0 0
      %1100 = vmatprep.subr.bf16.mxu0 0
      %1101 = vmatpush2.bf16.msra.mxu0 0
      %1102 = vmatprep.mubr.bf16.mxu0 0
      %1103 = vmatmul.mubr.bf16.gmra.mxu0 %v694
      %v1104 = vpop.f32.mrf.mxu0
      %v1105 = vadd.f32 %v568, %v1104
      %v1106 = vpop.f32.mrf.mxu0
      %v1107 = vpop.f32.mrf.mxu0
      %v1108 = vadd.f32 %v568, %v1107
      %v1109 = vpop.f32.mrf.mxu0
      %1110 = vmatprep.mubr.bf16.mxu0 0
      %1111 = vmatmul.mubr.bf16.gmra.mxu0 %v697
      %v1112 = vpop.f32.mrf.mxu0
      %v1113 = vadd.f32 %v568, %v1112
      %v1114 = vpop.f32.mrf.mxu0
      %v1115 = vpop.f32.mrf.mxu0
      %v1116 = vadd.f32 %v568, %v1115
      %v1117 = vpop.f32.mrf.mxu0
      %1118 = vmatprep.mubr.bf16.mxu0 0
      %1119 = vmatmul.mubr.bf16.gmra.mxu0 %v700
      %v1120 = vpop.f32.mrf.mxu0
      %v1121 = vadd.f32 %v568, %v1120
      %v1122 = vpop.f32.mrf.mxu0
      %v1123 = vpop.f32.mrf.mxu0
      %v1124 = vadd.f32 %v568, %v1123
      %v1125 = vpop.f32.mrf.mxu0
      %1126 = vmatprep.mubr.bf16.mxu0 0
      %1127 = vmatmul.mubr.bf16.gmra.mxu0 %v703
      %v1128 = vpop.f32.mrf.mxu0
      %v1129 = vadd.f32 %v568, %v1128
      %v1130 = vpop.f32.mrf.mxu0
      %v1131 = vpop.f32.mrf.mxu0
      %v1132 = vadd.f32 %v568, %v1131
      %v1133 = vpop.f32.mrf.mxu0
      %1134 = vdwg.mxu0
      %v1135 = vxor.u32 %v740, 2147483648
      %v1136 = vxor.u32 %v742, 2147483648
      %v1137 = vxor.u32 %v813, 2147483648
      %v1138 = vxor.u32 %v815, 2147483648
      %v1139 = vxor.u32 %v886, 2147483648
      %v1140 = vxor.u32 %v888, 2147483648
      %v1141 = vxor.u32 %v959, 2147483648
      %v1142 = vxor.u32 %v961, 2147483648
      %v1143 = vxor.u32 %v1032, 2147483648
      %v1144 = vxor.u32 %v1034, 2147483648
      %v1145 = vxor.u32 %v1105, 2147483648
      %v1146 = vxor.u32 %v744, 2147483648
      %v1147 = vxor.u32 %v746, 2147483648
      %v1148 = vxor.u32 %v817, 2147483648
      %v1149 = vxor.u32 %v819, 2147483648
      %v1150 = vxor.u32 %v890, 2147483648
      %v1151 = vxor.u32 %v892, 2147483648
      %v1152 = vxor.u32 %v963, 2147483648
      %v1153 = vxor.u32 %v965, 2147483648
      %v1154 = vxor.u32 %v1036, 2147483648
      %v1155 = vxor.u32 %v1038, 2147483648
      %v1156 = vxor.u32 %v1108, 2147483648
      %v1157 = vxor.u32 %v750, 2147483648
      %v1158 = vxor.u32 %v752, 2147483648
      %v1159 = vxor.u32 %v823, 2147483648
      %v1160 = vxor.u32 %v825, 2147483648
      %v1161 = vxor.u32 %v896, 2147483648
      %v1162 = vxor.u32 %v898, 2147483648
      %v1163 = vxor.u32 %v969, 2147483648
      %v1164 = vxor.u32 %v971, 2147483648
      %v1165 = vxor.u32 %v1042, 2147483648
      %v1166 = vxor.u32 %v1044, 2147483648
      %v1167 = vxor.u32 %v1113, 2147483648
      %v1168 = vxor.u32 %v754, 2147483648
      %v1169 = vxor.u32 %v756, 2147483648
      %v1170 = vxor.u32 %v827, 2147483648
      %v1171 = vxor.u32 %v829, 2147483648
      %v1172 = vxor.u32 %v900, 2147483648
      %v1173 = vxor.u32 %v902, 2147483648
      %v1174 = vxor.u32 %v973, 2147483648
      %v1175 = vxor.u32 %v975, 2147483648
      %v1176 = vxor.u32 %v1046, 2147483648
      %v1177 = vxor.u32 %v1048, 2147483648
      %v1178 = vxor.u32 %v1116, 2147483648
      %v1179 = vxor.u32 %v760, 2147483648
      %v1180 = vxor.u32 %v762, 2147483648
      %v1181 = vxor.u32 %v833, 2147483648
      %v1182 = vxor.u32 %v835, 2147483648
      %v1183 = vxor.u32 %v906, 2147483648
      %v1184 = vxor.u32 %v908, 2147483648
      %v1185 = vxor.u32 %v979, 2147483648
      %v1186 = vxor.u32 %v981, 2147483648
      %v1187 = vxor.u32 %v1052, 2147483648
      %v1188 = vxor.u32 %v1054, 2147483648
      %v1189 = vxor.u32 %v1121, 2147483648
      %v1190 = vxor.u32 %v764, 2147483648
      %v1191 = vxor.u32 %v766, 2147483648
      %v1192 = vxor.u32 %v837, 2147483648
      %v1193 = vxor.u32 %v839, 2147483648
      %v1194 = vxor.u32 %v910, 2147483648
      %v1195 = vxor.u32 %v912, 2147483648
      %v1196 = vxor.u32 %v983, 2147483648
      %v1197 = vxor.u32 %v985, 2147483648
      %v1198 = vxor.u32 %v1056, 2147483648
      %v1199 = vxor.u32 %v1058, 2147483648
      %v1200 = vxor.u32 %v1124, 2147483648
      %v1201 = vxor.u32 %v770, 2147483648
      %v1202 = vxor.u32 %v772, 2147483648
      %v1203 = vxor.u32 %v843, 2147483648
      %v1204 = vxor.u32 %v845, 2147483648
      %v1205 = vxor.u32 %v916, 2147483648
      %v1206 = vxor.u32 %v918, 2147483648
      %v1207 = vxor.u32 %v989, 2147483648
      %v1208 = vxor.u32 %v991, 2147483648
      %v1209 = vxor.u32 %v1062, 2147483648
      %v1210 = vxor.u32 %v1064, 2147483648
      %v1211 = vxor.u32 %v1129, 2147483648
      %v1212 = vxor.u32 %v774, 2147483648
      %v1213 = vxor.u32 %v776, 2147483648
      %v1214 = vxor.u32 %v847, 2147483648
      %v1215 = vxor.u32 %v849, 2147483648
      %v1216 = vxor.u32 %v920, 2147483648
      %v1217 = vxor.u32 %v922, 2147483648
      %v1218 = vxor.u32 %v993, 2147483648
      %v1219 = vxor.u32 %v995, 2147483648
      %v1220 = vxor.u32 %v1066, 2147483648
      %v1221 = vxor.u32 %v1068, 2147483648
      %v1222 = vxor.u32 %v1132, 2147483648
      %v1223 = vmul.f32 %v1135, 1.442695
      %v1224 = vpow.pop %v1223
      %v1225 = vmul.f32 %v1136, 1.442695
      %v1226 = vpow.pop %v1225
      %v1227 = vmul.f32 %v1137, 1.442695
      %v1228 = vpow.pop %v1227
      %v1229 = vmul.f32 %v1138, 1.442695
      %v1230 = vpow.pop %v1229
      %v1231 = vmul.f32 %v1139, 1.442695
      %v1232 = vpow.pop %v1231
      %v1233 = vmul.f32 %v1140, 1.442695
      %v1234 = vpow.pop %v1233
      %v1235 = vmul.f32 %v1141, 1.442695
      %v1236 = vpow.pop %v1235
      %v1237 = vmul.f32 %v1142, 1.442695
      %v1238 = vpow.pop %v1237
      %v1239 = vmul.f32 %v1143, 1.442695
      %v1240 = vpow.pop %v1239
      %v1241 = vmul.f32 %v1144, 1.442695
      %v1242 = vpow.pop %v1241
      %v1243 = vmul.f32 %v1145, 1.442695
      %v1244 = vpow.pop %v1243
      %v1245 = vmul.f32 %v1146, 1.442695
      %v1246 = vpow.pop %v1245
      %v1247 = vmul.f32 %v1147, 1.442695
      %v1248 = vpow.pop %v1247
      %v1249 = vmul.f32 %v1148, 1.442695
      %v1250 = vpow.pop %v1249
      %v1251 = vmul.f32 %v1149, 1.442695
      %v1252 = vpow.pop %v1251
      %v1253 = vmul.f32 %v1150, 1.442695
      %v1254 = vpow.pop %v1253
      %v1255 = vmul.f32 %v1151, 1.442695
      %v1256 = vpow.pop %v1255
      %v1257 = vmul.f32 %v1152, 1.442695
      %v1258 = vpow.pop %v1257
      %v1259 = vmul.f32 %v1153, 1.442695
      %v1260 = vpow.pop %v1259
      %v1261 = vmul.f32 %v1154, 1.442695
      %v1262 = vpow.pop %v1261
      %v1263 = vmul.f32 %v1155, 1.442695
      %v1264 = vpow.pop %v1263
      %v1265 = vmul.f32 %v1156, 1.442695
      %v1266 = vpow.pop %v1265
      %v1267 = vmul.f32 %v1157, 1.442695
      %v1268 = vpow.pop %v1267
      %v1269 = vmul.f32 %v1158, 1.442695
      %v1270 = vpow.pop %v1269
      %v1271 = vmul.f32 %v1159, 1.442695
      %v1272 = vpow.pop %v1271
      %v1273 = vmul.f32 %v1160, 1.442695
      %v1274 = vpow.pop %v1273
      %v1275 = vmul.f32 %v1161, 1.442695
      %v1276 = vpow.pop %v1275
      %v1277 = vmul.f32 %v1162, 1.442695
      %v1278 = vpow.pop %v1277
      %v1279 = vmul.f32 %v1163, 1.442695
      %v1280 = vpow.pop %v1279
      %v1281 = vmul.f32 %v1164, 1.442695
      %v1282 = vpow.pop %v1281
      %v1283 = vmul.f32 %v1165, 1.442695
      %v1284 = vpow.pop %v1283
      %v1285 = vmul.f32 %v1166, 1.442695
      %v1286 = vpow.pop %v1285
      %v1287 = vmul.f32 %v1167, 1.442695
      %v1288 = vpow.pop %v1287
      %v1289 = vmul.f32 %v1168, 1.442695
      %v1290 = vpow.pop %v1289
      %v1291 = vmul.f32 %v1169, 1.442695
      %v1292 = vpow.pop %v1291
      %v1293 = vmul.f32 %v1170, 1.442695
      %v1294 = vpow.pop %v1293
      %v1295 = vmul.f32 %v1171, 1.442695
      %v1296 = vpow.pop %v1295
      %v1297 = vmul.f32 %v1172, 1.442695
      %v1298 = vpow.pop %v1297
      %v1299 = vmul.f32 %v1173, 1.442695
      %v1300 = vpow.pop %v1299
      %v1301 = vmul.f32 %v1174, 1.442695
      %v1302 = vpow.pop %v1301
      %v1303 = vmul.f32 %v1175, 1.442695
      %v1304 = vpow.pop %v1303
      %v1305 = vmul.f32 %v1176, 1.442695
      %v1306 = vpow.pop %v1305
      %v1307 = vmul.f32 %v1177, 1.442695
      %v1308 = vpow.pop %v1307
      %v1309 = vmul.f32 %v1178, 1.442695
      %v1310 = vpow.pop %v1309
      %v1311 = vmul.f32 %v1179, 1.442695
      %v1312 = vpow.pop %v1311
      %v1313 = vmul.f32 %v1180, 1.442695
      %v1314 = vpow.pop %v1313
      %v1315 = vmul.f32 %v1181, 1.442695
      %v1316 = vpow.pop %v1315
      %v1317 = vmul.f32 %v1182, 1.442695
      %v1318 = vpow.pop %v1317
      %v1319 = vmul.f32 %v1183, 1.442695
      %v1320 = vpow.pop %v1319
      %v1321 = vmul.f32 %v1184, 1.442695
      %v1322 = vpow.pop %v1321
      %v1323 = vmul.f32 %v1185, 1.442695
      %v1324 = vpow.pop %v1323
      %v1325 = vmul.f32 %v1186, 1.442695
      %v1326 = vpow.pop %v1325
      %v1327 = vmul.f32 %v1187, 1.442695
      %v1328 = vpow.pop %v1327
      %v1329 = vmul.f32 %v1188, 1.442695
      %v1330 = vpow.pop %v1329
      %v1331 = vmul.f32 %v1189, 1.442695
      %v1332 = vpow.pop %v1331
      %v1333 = vmul.f32 %v1190, 1.442695
      %v1334 = vpow.pop %v1333
      %v1335 = vmul.f32 %v1191, 1.442695
      %v1336 = vpow.pop %v1335
      %v1337 = vmul.f32 %v1192, 1.442695
      %v1338 = vpow.pop %v1337
      %v1339 = vmul.f32 %v1193, 1.442695
      %v1340 = vpow.pop %v1339
      %v1341 = vmul.f32 %v1194, 1.442695
      %v1342 = vpow.pop %v1341
      %v1343 = vmul.f32 %v1195, 1.442695
      %v1344 = vpow.pop %v1343
      %v1345 = vmul.f32 %v1196, 1.442695
      %v1346 = vpow.pop %v1345
      %v1347 = vmul.f32 %v1197, 1.442695
      %v1348 = vpow.pop %v1347
      %v1349 = vmul.f32 %v1198, 1.442695
      %v1350 = vpow.pop %v1349
      %v1351 = vmul.f32 %v1199, 1.442695
      %v1352 = vpow.pop %v1351
      %v1353 = vmul.f32 %v1200, 1.442695
      %v1354 = vpow.pop %v1353
      %v1355 = vmul.f32 %v1201, 1.442695
      %v1356 = vpow.pop %v1355
      %v1357 = vmul.f32 %v1202, 1.442695
      %v1358 = vpow.pop %v1357
      %v1359 = vmul.f32 %v1203, 1.442695
      %v1360 = vpow.pop %v1359
      %v1361 = vmul.f32 %v1204, 1.442695
      %v1362 = vpow.pop %v1361
      %v1363 = vmul.f32 %v1205, 1.442695
      %v1364 = vpow.pop %v1363
      %v1365 = vmul.f32 %v1206, 1.442695
      %v1366 = vpow.pop %v1365
      %v1367 = vmul.f32 %v1207, 1.442695
      %v1368 = vpow.pop %v1367
      %v1369 = vmul.f32 %v1208, 1.442695
      %v1370 = vpow.pop %v1369
      %v1371 = vmul.f32 %v1209, 1.442695
      %v1372 = vpow.pop %v1371
      %v1373 = vmul.f32 %v1210, 1.442695
      %v1374 = vpow.pop %v1373
      %v1375 = vmul.f32 %v1211, 1.442695
      %v1376 = vpow.pop %v1375
      %v1377 = vmul.f32 %v1212, 1.442695
      %v1378 = vpow.pop %v1377
      %v1379 = vmul.f32 %v1213, 1.442695
      %v1380 = vpow.pop %v1379
      %v1381 = vmul.f32 %v1214, 1.442695
      %v1382 = vpow.pop %v1381
      %v1383 = vmul.f32 %v1215, 1.442695
      %v1384 = vpow.pop %v1383
      %v1385 = vmul.f32 %v1216, 1.442695
      %v1386 = vpow.pop %v1385
      %v1387 = vmul.f32 %v1217, 1.442695
      %v1388 = vpow.pop %v1387
      %v1389 = vmul.f32 %v1218, 1.442695
      %v1390 = vpow.pop %v1389
      %v1391 = vmul.f32 %v1219, 1.442695
      %v1392 = vpow.pop %v1391
      %v1393 = vmul.f32 %v1220, 1.442695
      %v1394 = vpow.pop %v1393
      %v1395 = vmul.f32 %v1221, 1.442695
      %v1396 = vpow.pop %v1395
      %v1397 = vmul.f32 %v1222, 1.442695
      %v1398 = vpow.pop %v1397
      %v1399 = vadd.f32 %v1224, 1.0
      %v1400 = vadd.f32 %v1226, 1.0
      %v1401 = vadd.f32 %v1228, 1.0
      %v1402 = vadd.f32 %v1230, 1.0
      %v1403 = vadd.f32 %v1232, 1.0
      %v1404 = vadd.f32 %v1234, 1.0
      %v1405 = vadd.f32 %v1236, 1.0
      %v1406 = vadd.f32 %v1238, 1.0
      %v1407 = vadd.f32 %v1240, 1.0
      %v1408 = vadd.f32 %v1242, 1.0
      %v1409 = vadd.f32 %v1244, 1.0
      %v1410 = vadd.f32 %v1246, 1.0
      %v1411 = vadd.f32 %v1248, 1.0
      %v1412 = vadd.f32 %v1250, 1.0
      %v1413 = vadd.f32 %v1252, 1.0
      %v1414 = vadd.f32 %v1254, 1.0
      %v1415 = vadd.f32 %v1256, 1.0
      %v1416 = vadd.f32 %v1258, 1.0
      %v1417 = vadd.f32 %v1260, 1.0
      %v1418 = vadd.f32 %v1262, 1.0
      %v1419 = vadd.f32 %v1264, 1.0
      %v1420 = vadd.f32 %v1266, 1.0
      %v1421 = vadd.f32 %v1268, 1.0
      %v1422 = vadd.f32 %v1270, 1.0
      %v1423 = vadd.f32 %v1272, 1.0
      %v1424 = vadd.f32 %v1274, 1.0
      %v1425 = vadd.f32 %v1276, 1.0
      %v1426 = vadd.f32 %v1278, 1.0
      %v1427 = vadd.f32 %v1280, 1.0
      %v1428 = vadd.f32 %v1282, 1.0
      %v1429 = vadd.f32 %v1284, 1.0
      %v1430 = vadd.f32 %v1286, 1.0
      %v1431 = vadd.f32 %v1288, 1.0
      %v1432 = vadd.f32 %v1290, 1.0
      %v1433 = vadd.f32 %v1292, 1.0
      %v1434 = vadd.f32 %v1294, 1.0
      %v1435 = vadd.f32 %v1296, 1.0
      %v1436 = vadd.f32 %v1298, 1.0
      %v1437 = vadd.f32 %v1300, 1.0
      %v1438 = vadd.f32 %v1302, 1.0
      %v1439 = vadd.f32 %v1304, 1.0
      %v1440 = vadd.f32 %v1306, 1.0
      %v1441 = vadd.f32 %v1308, 1.0
      %v1442 = vadd.f32 %v1310, 1.0
      %v1443 = vadd.f32 %v1312, 1.0
      %v1444 = vadd.f32 %v1314, 1.0
      %v1445 = vadd.f32 %v1316, 1.0
      %v1446 = vadd.f32 %v1318, 1.0
      %v1447 = vadd.f32 %v1320, 1.0
      %v1448 = vadd.f32 %v1322, 1.0
      %v1449 = vadd.f32 %v1324, 1.0
      %v1450 = vadd.f32 %v1326, 1.0
      %v1451 = vadd.f32 %v1328, 1.0
      %v1452 = vadd.f32 %v1330, 1.0
      %v1453 = vadd.f32 %v1332, 1.0
      %v1454 = vadd.f32 %v1334, 1.0
      %v1455 = vadd.f32 %v1336, 1.0
      %v1456 = vadd.f32 %v1338, 1.0
      %v1457 = vadd.f32 %v1340, 1.0
      %v1458 = vadd.f32 %v1342, 1.0
      %v1459 = vadd.f32 %v1344, 1.0
      %v1460 = vadd.f32 %v1346, 1.0
      %v1461 = vadd.f32 %v1348, 1.0
      %v1462 = vadd.f32 %v1350, 1.0
      %v1463 = vadd.f32 %v1352, 1.0
      %v1464 = vadd.f32 %v1354, 1.0
      %v1465 = vadd.f32 %v1356, 1.0
      %v1466 = vadd.f32 %v1358, 1.0
      %v1467 = vadd.f32 %v1360, 1.0
      %v1468 = vadd.f32 %v1362, 1.0
      %v1469 = vadd.f32 %v1364, 1.0
      %v1470 = vadd.f32 %v1366, 1.0
      %v1471 = vadd.f32 %v1368, 1.0
      %v1472 = vadd.f32 %v1370, 1.0
      %v1473 = vadd.f32 %v1372, 1.0
      %v1474 = vadd.f32 %v1374, 1.0
      %v1475 = vadd.f32 %v1376, 1.0
      %v1476 = vadd.f32 %v1378, 1.0
      %v1477 = vadd.f32 %v1380, 1.0
      %v1478 = vadd.f32 %v1382, 1.0
      %v1479 = vadd.f32 %v1384, 1.0
      %v1480 = vadd.f32 %v1386, 1.0
      %v1481 = vadd.f32 %v1388, 1.0
      %v1482 = vadd.f32 %v1390, 1.0
      %v1483 = vadd.f32 %v1392, 1.0
      %v1484 = vadd.f32 %v1394, 1.0
      %v1485 = vadd.f32 %v1396, 1.0
      %v1486 = vadd.f32 %v1398, 1.0
      %v1487 = vrcp.pop %v1399
      %v1488 = vmul.f32 1.0, %v1487
      %v1489 = vrcp.pop %v1400
      %v1490 = vmul.f32 1.0, %v1489
      %v1491 = vrcp.pop %v1401
      %v1492 = vmul.f32 1.0, %v1491
      %v1493 = vrcp.pop %v1402
      %v1494 = vmul.f32 1.0, %v1493
      %v1495 = vrcp.pop %v1403
      %v1496 = vmul.f32 1.0, %v1495
      %v1497 = vrcp.pop %v1404
      %v1498 = vmul.f32 1.0, %v1497
      %v1499 = vrcp.pop %v1405
      %v1500 = vmul.f32 1.0, %v1499
      %v1501 = vrcp.pop %v1406
      %v1502 = vmul.f32 1.0, %v1501
      %v1503 = vrcp.pop %v1407
      %v1504 = vmul.f32 1.0, %v1503
      %v1505 = vrcp.pop %v1408
      %v1506 = vmul.f32 1.0, %v1505
      %v1507 = vrcp.pop %v1409
      %v1508 = vmul.f32 1.0, %v1507
      %v1509 = vrcp.pop %v1410
      %v1510 = vmul.f32 1.0, %v1509
      %v1511 = vrcp.pop %v1411
      %v1512 = vmul.f32 1.0, %v1511
      %v1513 = vrcp.pop %v1412
      %v1514 = vmul.f32 1.0, %v1513
      %v1515 = vrcp.pop %v1413
      %v1516 = vmul.f32 1.0, %v1515
      %v1517 = vrcp.pop %v1414
      %v1518 = vmul.f32 1.0, %v1517
      %v1519 = vrcp.pop %v1415
      %v1520 = vmul.f32 1.0, %v1519
      %v1521 = vrcp.pop %v1416
      %v1522 = vmul.f32 1.0, %v1521
      %v1523 = vrcp.pop %v1417
      %v1524 = vmul.f32 1.0, %v1523
      %v1525 = vrcp.pop %v1418
      %v1526 = vmul.f32 1.0, %v1525
      %v1527 = vrcp.pop %v1419
      %v1528 = vmul.f32 1.0, %v1527
      %v1529 = vrcp.pop %v1420
      %v1530 = vmul.f32 1.0, %v1529
      %v1531 = vrcp.pop %v1421
      %v1532 = vmul.f32 1.0, %v1531
      %v1533 = vrcp.pop %v1422
      %v1534 = vmul.f32 1.0, %v1533
      %v1535 = vrcp.pop %v1423
      %v1536 = vmul.f32 1.0, %v1535
      %v1537 = vrcp.pop %v1424
      %v1538 = vmul.f32 1.0, %v1537
      %v1539 = vrcp.pop %v1425
      %v1540 = vmul.f32 1.0, %v1539
      %v1541 = vrcp.pop %v1426
      %v1542 = vmul.f32 1.0, %v1541
      %v1543 = vrcp.pop %v1427
      %v1544 = vmul.f32 1.0, %v1543
      %v1545 = vrcp.pop %v1428
      %v1546 = vmul.f32 1.0, %v1545
      %v1547 = vrcp.pop %v1429
      %v1548 = vmul.f32 1.0, %v1547
      %v1549 = vrcp.pop %v1430
      %v1550 = vmul.f32 1.0, %v1549
      %v1551 = vrcp.pop %v1431
      %v1552 = vmul.f32 1.0, %v1551
      %v1553 = vrcp.pop %v1432
      %v1554 = vmul.f32 1.0, %v1553
      %v1555 = vrcp.pop %v1433
      %v1556 = vmul.f32 1.0, %v1555
      %v1557 = vrcp.pop %v1434
      %v1558 = vmul.f32 1.0, %v1557
      %v1559 = vrcp.pop %v1435
      %v1560 = vmul.f32 1.0, %v1559
      %v1561 = vrcp.pop %v1436
      %v1562 = vmul.f32 1.0, %v1561
      %v1563 = vrcp.pop %v1437
      %v1564 = vmul.f32 1.0, %v1563
      %v1565 = vrcp.pop %v1438
      %v1566 = vmul.f32 1.0, %v1565
      %v1567 = vrcp.pop %v1439
      %v1568 = vmul.f32 1.0, %v1567
      %v1569 = vrcp.pop %v1440
      %v1570 = vmul.f32 1.0, %v1569
      %v1571 = vrcp.pop %v1441
      %v1572 = vmul.f32 1.0, %v1571
      %v1573 = vrcp.pop %v1442
      %v1574 = vmul.f32 1.0, %v1573
      %v1575 = vrcp.pop %v1443
      %v1576 = vmul.f32 1.0, %v1575
      %v1577 = vrcp.pop %v1444
      %v1578 = vmul.f32 1.0, %v1577
      %v1579 = vrcp.pop %v1445
      %v1580 = vmul.f32 1.0, %v1579
      %v1581 = vrcp.pop %v1446
      %v1582 = vmul.f32 1.0, %v1581
      %v1583 = vrcp.pop %v1447
      %v1584 = vmul.f32 1.0, %v1583
      %v1585 = vrcp.pop %v1448
      %v1586 = vmul.f32 1.0, %v1585
      %v1587 = vrcp.pop %v1449
      %v1588 = vmul.f32 1.0, %v1587
      %v1589 = vrcp.pop %v1450
      %v1590 = vmul.f32 1.0, %v1589
      %v1591 = vrcp.pop %v1451
      %v1592 = vmul.f32 1.0, %v1591
      %v1593 = vrcp.pop %v1452
      %v1594 = vmul.f32 1.0, %v1593
      %v1595 = vrcp.pop %v1453
      %v1596 = vmul.f32 1.0, %v1595
      %v1597 = vrcp.pop %v1454
      %v1598 = vmul.f32 1.0, %v1597
      %v1599 = vrcp.pop %v1455
      %v1600 = vmul.f32 1.0, %v1599
      %v1601 = vrcp.pop %v1456
      %v1602 = vmul.f32 1.0, %v1601
      %v1603 = vrcp.pop %v1457
      %v1604 = vmul.f32 1.0, %v1603
      %v1605 = vrcp.pop %v1458
      %v1606 = vmul.f32 1.0, %v1605
      %v1607 = vrcp.pop %v1459
      %v1608 = vmul.f32 1.0, %v1607
      %v1609 = vrcp.pop %v1460
      %v1610 = vmul.f32 1.0, %v1609
      %v1611 = vrcp.pop %v1461
      %v1612 = vmul.f32 1.0, %v1611
      %v1613 = vrcp.pop %v1462
      %v1614 = vmul.f32 1.0, %v1613
      %v1615 = vrcp.pop %v1463
      %v1616 = vmul.f32 1.0, %v1615
      %v1617 = vrcp.pop %v1464
      %v1618 = vmul.f32 1.0, %v1617
      %v1619 = vrcp.pop %v1465
      %v1620 = vmul.f32 1.0, %v1619
      %v1621 = vrcp.pop %v1466
      %v1622 = vmul.f32 1.0, %v1621
      %v1623 = vrcp.pop %v1467
      %v1624 = vmul.f32 1.0, %v1623
      %v1625 = vrcp.pop %v1468
      %v1626 = vmul.f32 1.0, %v1625
      %v1627 = vrcp.pop %v1469
      %v1628 = vmul.f32 1.0, %v1627
      %v1629 = vrcp.pop %v1470
      %v1630 = vmul.f32 1.0, %v1629
      %v1631 = vrcp.pop %v1471
      %v1632 = vmul.f32 1.0, %v1631
      %v1633 = vrcp.pop %v1472
      %v1634 = vmul.f32 1.0, %v1633
      %v1635 = vrcp.pop %v1473
      %v1636 = vmul.f32 1.0, %v1635
      %v1637 = vrcp.pop %v1474
      %v1638 = vmul.f32 1.0, %v1637
      %v1639 = vrcp.pop %v1475
      %v1640 = vmul.f32 1.0, %v1639
      %v1641 = vrcp.pop %v1476
      %v1642 = vmul.f32 1.0, %v1641
      %v1643 = vrcp.pop %v1477
      %v1644 = vmul.f32 1.0, %v1643
      %v1645 = vrcp.pop %v1478
      %v1646 = vmul.f32 1.0, %v1645
      %v1647 = vrcp.pop %v1479
      %v1648 = vmul.f32 1.0, %v1647
      %v1649 = vrcp.pop %v1480
      %v1650 = vmul.f32 1.0, %v1649
      %v1651 = vrcp.pop %v1481
      %v1652 = vmul.f32 1.0, %v1651
      %v1653 = vrcp.pop %v1482
      %v1654 = vmul.f32 1.0, %v1653
      %v1655 = vrcp.pop %v1483
      %v1656 = vmul.f32 1.0, %v1655
      %v1657 = vrcp.pop %v1484
      %v1658 = vmul.f32 1.0, %v1657
      %v1659 = vrcp.pop %v1485
      %v1660 = vmul.f32 1.0, %v1659
      %v1661 = vrcp.pop %v1486
      %v1662 = vmul.f32 1.0, %v1661
      %v1663 = vmul.f32 %v740, %v1488
      %v1664 = vmul.f32 %v742, %v1490
      %v1665 = vmul.f32 %v813, %v1492
      %v1666 = vmul.f32 %v815, %v1494
      %v1667 = vmul.f32 %v886, %v1496
      %v1668 = vmul.f32 %v888, %v1498
      %v1669 = vmul.f32 %v959, %v1500
      %v1670 = vmul.f32 %v961, %v1502
      %v1671 = vmul.f32 %v1032, %v1504
      %v1672 = vmul.f32 %v1034, %v1506
      %v1673 = vmul.f32 %v1105, %v1508
      %v1674 = vmul.f32 %v744, %v1510
      %v1675 = vmul.f32 %v746, %v1512
      %v1676 = vmul.f32 %v817, %v1514
      %v1677 = vmul.f32 %v819, %v1516
      %v1678 = vmul.f32 %v890, %v1518
      %v1679 = vmul.f32 %v892, %v1520
      %v1680 = vmul.f32 %v963, %v1522
      %v1681 = vmul.f32 %v965, %v1524
      %v1682 = vmul.f32 %v1036, %v1526
      %v1683 = vmul.f32 %v1038, %v1528
      %v1684 = vmul.f32 %v1108, %v1530
      %v1685 = vmul.f32 %v750, %v1532
      %v1686 = vmul.f32 %v752, %v1534
      %v1687 = vmul.f32 %v823, %v1536
      %v1688 = vmul.f32 %v825, %v1538
      %v1689 = vmul.f32 %v896, %v1540
      %v1690 = vmul.f32 %v898, %v1542
      %v1691 = vmul.f32 %v969, %v1544
      %v1692 = vmul.f32 %v971, %v1546
      %v1693 = vmul.f32 %v1042, %v1548
      %v1694 = vmul.f32 %v1044, %v1550
      %v1695 = vmul.f32 %v1113, %v1552
      %v1696 = vmul.f32 %v754, %v1554
      %v1697 = vmul.f32 %v756, %v1556
      %v1698 = vmul.f32 %v827, %v1558
      %v1699 = vmul.f32 %v829, %v1560
      %v1700 = vmul.f32 %v900, %v1562
      %v1701 = vmul.f32 %v902, %v1564
      %v1702 = vmul.f32 %v973, %v1566
      %v1703 = vmul.f32 %v975, %v1568
      %v1704 = vmul.f32 %v1046, %v1570
      %v1705 = vmul.f32 %v1048, %v1572
      %v1706 = vmul.f32 %v1116, %v1574
      %v1707 = vmul.f32 %v760, %v1576
      %v1708 = vmul.f32 %v762, %v1578
      %v1709 = vmul.f32 %v833, %v1580
      %v1710 = vmul.f32 %v835, %v1582
      %v1711 = vmul.f32 %v906, %v1584
      %v1712 = vmul.f32 %v908, %v1586
      %v1713 = vmul.f32 %v979, %v1588
      %v1714 = vmul.f32 %v981, %v1590
      %v1715 = vmul.f32 %v1052, %v1592
      %v1716 = vmul.f32 %v1054, %v1594
      %v1717 = vmul.f32 %v1121, %v1596
      %v1718 = vmul.f32 %v764, %v1598
      %v1719 = vmul.f32 %v766, %v1600
      %v1720 = vmul.f32 %v837, %v1602
      %v1721 = vmul.f32 %v839, %v1604
      %v1722 = vmul.f32 %v910, %v1606
      %v1723 = vmul.f32 %v912, %v1608
      %v1724 = vmul.f32 %v983, %v1610
      %v1725 = vmul.f32 %v985, %v1612
      %v1726 = vmul.f32 %v1056, %v1614
      %v1727 = vmul.f32 %v1058, %v1616
      %v1728 = vmul.f32 %v1124, %v1618
      %v1729 = vmul.f32 %v770, %v1620
      %v1730 = vmul.f32 %v772, %v1622
      %v1731 = vmul.f32 %v843, %v1624
      %v1732 = vmul.f32 %v845, %v1626
      %v1733 = vmul.f32 %v916, %v1628
      %v1734 = vmul.f32 %v918, %v1630
      %v1735 = vmul.f32 %v989, %v1632
      %v1736 = vmul.f32 %v991, %v1634
      %v1737 = vmul.f32 %v1062, %v1636
      %v1738 = vmul.f32 %v1064, %v1638
      %v1739 = vmul.f32 %v1129, %v1640
      %v1740 = vmul.f32 %v774, %v1642
      %v1741 = vmul.f32 %v776, %v1644
      %v1742 = vmul.f32 %v847, %v1646
      %v1743 = vmul.f32 %v849, %v1648
      %v1744 = vmul.f32 %v920, %v1650
      %v1745 = vmul.f32 %v922, %v1652
      %v1746 = vmul.f32 %v993, %v1654
      %v1747 = vmul.f32 %v995, %v1656
      %v1748 = vmul.f32 %v1066, %v1658
      %v1749 = vmul.f32 %v1068, %v1660
      %v1750 = vmul.f32 %v1132, %v1662
      %s1751 = smul.u32 %s25, 64
      %v1752 = vlaneseq
      %v1753 = vshrl.u32 %v1752, 7
      %v1754 = vadd.s32 %v1753, 8
      %v1755 = vadd.s32 %v1753, 16
      %v1756 = vadd.s32 %v1753, 24
      %v1757 = vadd.s32 %v1753, 32
      %v1758 = vadd.s32 %v1753, 40
      %v1759 = vadd.s32 %v1753, 48
      %v1760 = vadd.s32 %v1753, 56
      %v1761 = vstv %s1751
      %v1762 = vadd.s32 %v1761, %v1753
      %v1763 = vadd.s32 %v1761, %v1754
      %v1764 = vadd.s32 %v1761, %v1755
      %v1765 = vadd.s32 %v1761, %v1756
      %v1766 = vadd.s32 %v1761, %v1757
      %v1767 = vadd.s32 %v1761, %v1758
      %v1768 = vadd.s32 %v1761, %v1759
      %v1769 = vadd.s32 %v1761, %v1760
      %vm1770 = vcmp.lt.s32.totalorder %v1762, 64
      %vm1771 = vcmp.lt.s32.totalorder %v1763, 64
      %vm1772 = vcmp.lt.s32.totalorder %v1764, 64
      %vm1773 = vcmp.lt.s32.totalorder %v1765, 64
      %vm1774 = vcmp.lt.s32.totalorder %v1766, 64
      %vm1775 = vcmp.lt.s32.totalorder %v1767, 64
      %vm1776 = vcmp.lt.s32.totalorder %v1768, 64
      %vm1777 = vcmp.lt.s32.totalorder %v1769, 64
      %v1778 = vsel %vm1770, 1, 0
      %v1779 = vsel %vm1771, 1, 0
      %v1780 = vsel %vm1772, 1, 0
      %v1781 = vsel %vm1773, 1, 0
      %v1782 = vsel %vm1774, 1, 0
      %v1783 = vsel %vm1775, 1, 0
      %v1784 = vsel %vm1776, 1, 0
      %v1785 = vsel %vm1777, 1, 0
      %vm1786 = vcmp.eq.s32.totalorder %v1778, 1
      %vm1787 = vcmp.eq.s32.totalorder %v1779, 1
      %vm1788 = vcmp.eq.s32.totalorder %v1780, 1
      %vm1789 = vcmp.eq.s32.totalorder %v1781, 1
      %vm1790 = vcmp.eq.s32.totalorder %v1782, 1
      %vm1791 = vcmp.eq.s32.totalorder %v1783, 1
      %vm1792 = vcmp.eq.s32.totalorder %v1784, 1
      %vm1793 = vcmp.eq.s32.totalorder %v1785, 1
      %v1794 = vsel %vm1786, %v1663, 0.0
      %v1795 = vsel %vm1786, %v1664, 0.0
      %v1796 = vsel %vm1786, %v1665, 0.0
      %v1797 = vsel %vm1786, %v1666, 0.0
      %v1798 = vsel %vm1786, %v1667, 0.0
      %v1799 = vsel %vm1786, %v1668, 0.0
      %v1800 = vsel %vm1786, %v1669, 0.0
      %v1801 = vsel %vm1786, %v1670, 0.0
      %v1802 = vsel %vm1786, %v1671, 0.0
      %v1803 = vsel %vm1786, %v1672, 0.0
      %v1804 = vsel %vm1786, %v1673, 0.0
      %v1805 = vsel %vm1787, %v1674, 0.0
      %v1806 = vsel %vm1787, %v1675, 0.0
      %v1807 = vsel %vm1787, %v1676, 0.0
      %v1808 = vsel %vm1787, %v1677, 0.0
      %v1809 = vsel %vm1787, %v1678, 0.0
      %v1810 = vsel %vm1787, %v1679, 0.0
      %v1811 = vsel %vm1787, %v1680, 0.0
      %v1812 = vsel %vm1787, %v1681, 0.0
      %v1813 = vsel %vm1787, %v1682, 0.0
      %v1814 = vsel %vm1787, %v1683, 0.0
      %v1815 = vsel %vm1787, %v1684, 0.0
      %v1816 = vsel %vm1788, %v1685, 0.0
      %v1817 = vsel %vm1788, %v1686, 0.0
      %v1818 = vsel %vm1788, %v1687, 0.0
      %v1819 = vsel %vm1788, %v1688, 0.0
      %v1820 = vsel %vm1788, %v1689, 0.0
      %v1821 = vsel %vm1788, %v1690, 0.0
      %v1822 = vsel %vm1788, %v1691, 0.0
      %v1823 = vsel %vm1788, %v1692, 0.0
      %v1824 = vsel %vm1788, %v1693, 0.0
      %v1825 = vsel %vm1788, %v1694, 0.0
      %v1826 = vsel %vm1788, %v1695, 0.0
      %v1827 = vsel %vm1789, %v1696, 0.0
      %v1828 = vsel %vm1789, %v1697, 0.0
      %v1829 = vsel %vm1789, %v1698, 0.0
      %v1830 = vsel %vm1789, %v1699, 0.0
      %v1831 = vsel %vm1789, %v1700, 0.0
      %v1832 = vsel %vm1789, %v1701, 0.0
      %v1833 = vsel %vm1789, %v1702, 0.0
      %v1834 = vsel %vm1789, %v1703, 0.0
      %v1835 = vsel %vm1789, %v1704, 0.0
      %v1836 = vsel %vm1789, %v1705, 0.0
      %v1837 = vsel %vm1789, %v1706, 0.0
      %v1838 = vsel %vm1790, %v1707, 0.0
      %v1839 = vsel %vm1790, %v1708, 0.0
      %v1840 = vsel %vm1790, %v1709, 0.0
      %v1841 = vsel %vm1790, %v1710, 0.0
      %v1842 = vsel %vm1790, %v1711, 0.0
      %v1843 = vsel %vm1790, %v1712, 0.0
      %v1844 = vsel %vm1790, %v1713, 0.0
      %v1845 = vsel %vm1790, %v1714, 0.0
      %v1846 = vsel %vm1790, %v1715, 0.0
      %v1847 = vsel %vm1790, %v1716, 0.0
      %v1848 = vsel %vm1790, %v1717, 0.0
      %v1849 = vsel %vm1791, %v1718, 0.0
      %v1850 = vsel %vm1791, %v1719, 0.0
      %v1851 = vsel %vm1791, %v1720, 0.0
      %v1852 = vsel %vm1791, %v1721, 0.0
      %v1853 = vsel %vm1791, %v1722, 0.0
      %v1854 = vsel %vm1791, %v1723, 0.0
      %v1855 = vsel %vm1791, %v1724, 0.0
      %v1856 = vsel %vm1791, %v1725, 0.0
      %v1857 = vsel %vm1791, %v1726, 0.0
      %v1858 = vsel %vm1791, %v1727, 0.0
      %v1859 = vsel %vm1791, %v1728, 0.0
      %v1860 = vsel %vm1792, %v1729, 0.0
      %v1861 = vsel %vm1792, %v1730, 0.0
      %v1862 = vsel %vm1792, %v1731, 0.0
      %v1863 = vsel %vm1792, %v1732, 0.0
      %v1864 = vsel %vm1792, %v1733, 0.0
      %v1865 = vsel %vm1792, %v1734, 0.0
      %v1866 = vsel %vm1792, %v1735, 0.0
      %v1867 = vsel %vm1792, %v1736, 0.0
      %v1868 = vsel %vm1792, %v1737, 0.0
      %v1869 = vsel %vm1792, %v1738, 0.0
      %v1870 = vsel %vm1792, %v1739, 0.0
      %v1871 = vsel %vm1793, %v1740, 0.0
      %v1872 = vsel %vm1793, %v1741, 0.0
      %v1873 = vsel %vm1793, %v1742, 0.0
      %v1874 = vsel %vm1793, %v1743, 0.0
      %v1875 = vsel %vm1793, %v1744, 0.0
      %v1876 = vsel %vm1793, %v1745, 0.0
      %v1877 = vsel %vm1793, %v1746, 0.0
      %v1878 = vsel %vm1793, %v1747, 0.0
      %v1879 = vsel %vm1793, %v1748, 0.0
      %v1880 = vsel %vm1793, %v1749, 0.0
      %v1881 = vsel %vm1793, %v1750, 0.0
      %v1882 = vld [vmem:[#allocation2] sm:$0xff]
      %v1883 = vld [vmem:[#allocation2 + $0x8] sm:$0x7]
      %v1884 = vadd.f32 %v1794, %v1805
      %v1885 = vadd.f32 %v1884, %v1816
      %v1886 = vadd.f32 %v1885, %v1827
      %v1887 = vadd.f32 %v1886, %v1838
      %v1888 = vadd.f32 %v1887, %v1849
      %v1889 = vadd.f32 %v1888, %v1860
      %v1890 = vadd.f32 %v1889, %v1871
      %v1891 = vrot.slane %v1890, 4
      %v1892 = vadd.f32 %v1890, %v1891
      %v1893 = vrot.slane %v1892, 2
      %v1894 = vadd.f32 %v1892, %v1893
      %v1895 = vrot.slane %v1894, 1
      %v1896 = vadd.f32 %v1894, %v1895
      %v1897 = vadd.f32 %v1795, %v1806
      %v1898 = vadd.f32 %v1897, %v1817
      %v1899 = vadd.f32 %v1898, %v1828
      %v1900 = vadd.f32 %v1899, %v1839
      %v1901 = vadd.f32 %v1900, %v1850
      %v1902 = vadd.f32 %v1901, %v1861
      %v1903 = vadd.f32 %v1902, %v1872
      %v1904 = vrot.slane %v1903, 4
      %v1905 = vadd.f32 %v1903, %v1904
      %v1906 = vrot.slane %v1905, 2
      %v1907 = vadd.f32 %v1905, %v1906
      %v1908 = vrot.slane %v1907, 1
      %v1909 = vadd.f32 %v1907, %v1908
      %v1910 = vadd.f32 %v1796, %v1807
      %v1911 = vadd.f32 %v1910, %v1818
      %v1912 = vadd.f32 %v1911, %v1829
      %v1913 = vadd.f32 %v1912, %v1840
      %v1914 = vadd.f32 %v1913, %v1851
      %v1915 = vadd.f32 %v1914, %v1862
      %v1916 = vadd.f32 %v1915, %v1873
      %v1917 = vrot.slane %v1916, 4
      %v1918 = vadd.f32 %v1916, %v1917
      %v1919 = vrot.slane %v1918, 2
      %v1920 = vadd.f32 %v1918, %v1919
      %v1921 = vrot.slane %v1920, 1
      %v1922 = vadd.f32 %v1920, %v1921
      %v1923 = vadd.f32 %v1797, %v1808
      %v1924 = vadd.f32 %v1923, %v1819
      %v1925 = vadd.f32 %v1924, %v1830
      %v1926 = vadd.f32 %v1925, %v1841
      %v1927 = vadd.f32 %v1926, %v1852
      %v1928 = vadd.f32 %v1927, %v1863
      %v1929 = vadd.f32 %v1928, %v1874
      %v1930 = vrot.slane %v1929, 4
      %v1931 = vadd.f32 %v1929, %v1930
      %v1932 = vrot.slane %v1931, 2
      %v1933 = vadd.f32 %v1931, %v1932
      %v1934 = vrot.slane %v1933, 1
      %v1935 = vadd.f32 %v1933, %v1934
      %v1936 = vadd.f32 %v1798, %v1809
      %v1937 = vadd.f32 %v1936, %v1820
      %v1938 = vadd.f32 %v1937, %v1831
      %v1939 = vadd.f32 %v1938, %v1842
      %v1940 = vadd.f32 %v1939, %v1853
      %v1941 = vadd.f32 %v1940, %v1864
      %v1942 = vadd.f32 %v1941, %v1875
      %v1943 = vrot.slane %v1942, 4
      %v1944 = vadd.f32 %v1942, %v1943
      %v1945 = vrot.slane %v1944, 2
      %v1946 = vadd.f32 %v1944, %v1945
      %v1947 = vrot.slane %v1946, 1
      %v1948 = vadd.f32 %v1946, %v1947
      %v1949 = vadd.f32 %v1799, %v1810
      %v1950 = vadd.f32 %v1949, %v1821
      %v1951 = vadd.f32 %v1950, %v1832
      %v1952 = vadd.f32 %v1951, %v1843
      %v1953 = vadd.f32 %v1952, %v1854
      %v1954 = vadd.f32 %v1953, %v1865
      %v1955 = vadd.f32 %v1954, %v1876
      %v1956 = vrot.slane %v1955, 4
      %v1957 = vadd.f32 %v1955, %v1956
      %v1958 = vrot.slane %v1957, 2
      %v1959 = vadd.f32 %v1957, %v1958
      %v1960 = vrot.slane %v1959, 1
      %v1961 = vadd.f32 %v1959, %v1960
      %v1962 = vadd.f32 %v1800, %v1811
      %v1963 = vadd.f32 %v1962, %v1822
      %v1964 = vadd.f32 %v1963, %v1833
      %v1965 = vadd.f32 %v1964, %v1844
      %v1966 = vadd.f32 %v1965, %v1855
      %v1967 = vadd.f32 %v1966, %v1866
      %v1968 = vadd.f32 %v1967, %v1877
      %v1969 = vrot.slane %v1968, 4
      %v1970 = vadd.f32 %v1968, %v1969
      %v1971 = vrot.slane %v1970, 2
      %v1972 = vadd.f32 %v1970, %v1971
      %v1973 = vrot.slane %v1972, 1
      %v1974 = vadd.f32 %v1972, %v1973
      %v1975 = vadd.f32 %v1801, %v1812
      %v1976 = vadd.f32 %v1975, %v1823
      %v1977 = vadd.f32 %v1976, %v1834
      %v1978 = vadd.f32 %v1977, %v1845
      %v1979 = vadd.f32 %v1978, %v1856
      %v1980 = vadd.f32 %v1979, %v1867
      %v1981 = vadd.f32 %v1980, %v1878
      %v1982 = vrot.slane %v1981, 4
      %v1983 = vadd.f32 %v1981, %v1982
      %v1984 = vrot.slane %v1983, 2
      %v1985 = vadd.f32 %v1983, %v1984
      %v1986 = vrot.slane %v1985, 1
      %v1987 = vadd.f32 %v1985, %v1986
      %v1988 = vadd.f32 %v1802, %v1813
      %v1989 = vadd.f32 %v1988, %v1824
      %v1990 = vadd.f32 %v1989, %v1835
      %v1991 = vadd.f32 %v1990, %v1846
      %v1992 = vadd.f32 %v1991, %v1857
      %v1993 = vadd.f32 %v1992, %v1868
      %v1994 = vadd.f32 %v1993, %v1879
      %v1995 = vrot.slane %v1994, 4
      %v1996 = vadd.f32 %v1994, %v1995
      %v1997 = vrot.slane %v1996, 2
      %v1998 = vadd.f32 %v1996, %v1997
      %v1999 = vrot.slane %v1998, 1
      %v2000 = vadd.f32 %v1998, %v1999
      %v2001 = vadd.f32 %v1803, %v1814
      %v2002 = vadd.f32 %v2001, %v1825
      %v2003 = vadd.f32 %v2002, %v1836
      %v2004 = vadd.f32 %v2003, %v1847
      %v2005 = vadd.f32 %v2004, %v1858
      %v2006 = vadd.f32 %v2005, %v1869
      %v2007 = vadd.f32 %v2006, %v1880
      %v2008 = vrot.slane %v2007, 4
      %v2009 = vadd.f32 %v2007, %v2008
      %v2010 = vrot.slane %v2009, 2
      %v2011 = vadd.f32 %v2009, %v2010
      %v2012 = vrot.slane %v2011, 1
      %v2013 = vadd.f32 %v2011, %v2012
      %v2014 = vadd.f32 %v1804, %v1815
      %v2015 = vadd.f32 %v2014, %v1826
      %v2016 = vadd.f32 %v2015, %v1837
      %v2017 = vadd.f32 %v2016, %v1848
      %v2018 = vadd.f32 %v2017, %v1859
      %v2019 = vadd.f32 %v2018, %v1870
      %v2020 = vadd.f32 %v2019, %v1881
      %v2021 = vrot.slane %v2020, 4
      %v2022 = vadd.f32 %v2020, %v2021
      %v2023 = vrot.slane %v2022, 2
      %v2024 = vadd.f32 %v2022, %v2023
      %v2025 = vrot.slane %v2024, 1
      %v2026 = vadd.f32 %v2024, %v2025
      %v2038 = vcombine.low %v1896, %v1909
      %v2039 = vcombine.low %v1922, %v1935
      %v2040 = vcombine.low %v1948, %v1961
      %v2041 = vcombine.low %v1974, %v1987
      %v2043 = vunpack.c.l.s4 1966171168
      %v2044 = vunpack.c.0.s8 %v2043
      %v2045 = vlaneseq
      %v2046 = vshrl.u32 %v2045, 7
      %v2047 = vsub.s32 %v2044, %v2046
      %v2048 = vrot.slane %v2038, %v2047
      %v2050 = vunpack.c.l.s4 1966171168
      %v2051 = vunpack.c.0.s8 %v2050
      %v2052 = vlaneseq
      %v2053 = vshrl.u32 %v2052, 7
      %v2054 = vsub.s32 %v2051, %v2053
      %v2055 = vrot.slane %v2039, %v2054
      %v2057 = vunpack.c.l.s4 1966171168
      %v2058 = vunpack.c.0.s8 %v2057
      %v2059 = vlaneseq
      %v2060 = vshrl.u32 %v2059, 7
      %v2061 = vsub.s32 %v2058, %v2060
      %v2062 = vrot.slane %v2040, %v2061
      %v2064 = vunpack.c.l.s4 1966171168
      %v2065 = vunpack.c.0.s8 %v2064
      %v2066 = vlaneseq
      %v2067 = vshrl.u32 %v2066, 7
      %v2068 = vsub.s32 %v2065, %v2067
      %v2069 = vrot.slane %v2041, %v2068
      %v2070 = vcombine.low %v2048, %v2055
      %v2071 = vcombine.low %v2062, %v2069
      %v2073 = vunpack.c.l.s4 1966171168
      %v2074 = vunpack.c.0.s8 %v2073
      %v2075 = vlaneseq
      %v2076 = vshrl.u32 %v2075, 7
      %v2077 = vsub.s32 %v2074, %v2076
      %v2078 = vrot.slane %v2070, %v2077
      %v2080 = vunpack.c.l.s4 1966171168
      %v2081 = vunpack.c.0.s8 %v2080
      %v2082 = vlaneseq
      %v2083 = vshrl.u32 %v2082, 7
      %v2084 = vsub.s32 %v2081, %v2083
      %v2085 = vrot.slane %v2071, %v2084
      %v2086 = vcombine.low %v2078, %v2085
      %v2087 = vcombine.low %v2000, %v2013
      %v2089 = vunpack.c.l.s4 1966171168
      %v2090 = vunpack.c.0.s8 %v2089
      %v2091 = vlaneseq
      %v2092 = vshrl.u32 %v2091, 7
      %v2093 = vsub.s32 %v2090, %v2092
      %v2094 = vrot.slane %v2087, %v2093
      %v2096 = vunpack.c.l.s4 1966171168
      %v2097 = vunpack.c.0.s8 %v2096
      %v2098 = vlaneseq
      %v2099 = vshrl.u32 %v2098, 7
      %v2100 = vsub.s32 %v2097, %v2099
      %v2101 = vrot.slane %v2026, %v2100
      %v2102 = vcombine.low %v2094, %v2101
      %v2104 = vunpack.c.l.s4 1966171168
      %v2105 = vunpack.c.0.s8 %v2104
      %v2106 = vlaneseq
      %v2107 = vshrl.u32 %v2106, 7
      %v2108 = vsub.s32 %v2105, %v2107
      %v2109 = vrot.slane %v2102, %v2108
      %v2112 = vadd.f32 %v1882, %v2086
      %v2113 = vadd.f32 %v1883, %v2109
      %2114 = vst [vmem:[#allocation2] sm:$0xff] %v2112
      %v2115 = vlaneseq
      %vm2116 = vcmp.ge.s32.totalorder %v2115, 0
      %vm2117 = vcmp.lt.s32.totalorder %v2115, 384
      %vm2118 = vmand %vm2116, %vm2117
      %2119 = vst.msk [vmem:[#allocation2 + $0x8] sm:$0x7] %vm2118, %v2113
      // Predicated region
      $region53: #{custom_model_forward.1} parent=47 // pred_check
        %p2120 = pneg %p306
      $region54: #{custom_model_forward.1} parent=47 // pred_check_branch
        %2122 = sbr.rel (%p2120) target = $region56
      $region55: #{custom_model_forward.1} parent=47 // pred_region
        %v2123 = vld [vmem:[#allocation2] sm:$0xff]
        %v2124 = vld [vmem:[#allocation2 + $0x8] sm:$0x7]
        %v2125 = vld [vmem:[%s5] sm:$0xff]
        %v2126 = vld [vmem:[%s5 + $0x8] sm:$0x7]
        %v2127 = vmul.f32 %v2123, %v2125
        %v2128 = vmul.f32 %v2124, %v2126
        %v2131 = vlaneseq
        %v2132 = vshrl.u32 %v2131, 7
        %v2133 = vsub.s32 0, %v2132
        %v2134 = vrot.slane %v2127, %v2133
        %v2135 = vlaneseq
        %v2136 = vshrl.u32 %v2135, 7
        %v2137 = vsub.s32 1, %v2136
        %v2138 = vrot.slane %v2127, %v2137
        %v2139 = vlaneseq
        %v2140 = vshrl.u32 %v2139, 7
        %v2141 = vsub.s32 2, %v2140
        %v2142 = vrot.slane %v2127, %v2141
        %v2143 = vlaneseq
        %v2144 = vshrl.u32 %v2143, 7
        %v2145 = vsub.s32 3, %v2144
        %v2146 = vrot.slane %v2127, %v2145
        %v2147 = vlaneseq
        %v2148 = vshrl.u32 %v2147, 7
        %v2149 = vsub.s32 4, %v2148
        %v2150 = vrot.slane %v2127, %v2149
        %v2151 = vlaneseq
        %v2152 = vshrl.u32 %v2151, 7
        %v2153 = vsub.s32 5, %v2152
        %v2154 = vrot.slane %v2127, %v2153
        %v2155 = vlaneseq
        %v2156 = vshrl.u32 %v2155, 7
        %v2157 = vsub.s32 6, %v2156
        %v2158 = vrot.slane %v2127, %v2157
        %v2159 = vlaneseq
        %v2160 = vshrl.u32 %v2159, 7
        %v2161 = vsub.s32 7, %v2160
        %v2162 = vrot.slane %v2127, %v2161
        %v2163 = vlaneseq
        %v2164 = vshrl.u32 %v2163, 7
        %v2165 = vsub.s32 0, %v2164
        %v2166 = vrot.slane %v2128, %v2165
        %v2167 = vlaneseq
        %v2168 = vshrl.u32 %v2167, 7
        %v2169 = vsub.s32 1, %v2168
        %v2170 = vrot.slane %v2128, %v2169
        %v2171 = vlaneseq
        %v2172 = vshrl.u32 %v2171, 7
        %v2173 = vsub.s32 2, %v2172
        %v2174 = vrot.slane %v2128, %v2173
        %vm2186 = vcmask 1040384
        %v2187 = vsel %vm2186, %v2134, 0.0
        %v2188 = vsel %vm2186, %v2138, 0.0
        %v2189 = vadd.f32 %v2187, %v2188
        %v2190 = vsel %vm2186, %v2142, 0.0
        %v2191 = vadd.f32 %v2189, %v2190
        %v2192 = vsel %vm2186, %v2146, 0.0
        %v2193 = vadd.f32 %v2191, %v2192
        %v2194 = vsel %vm2186, %v2150, 0.0
        %v2195 = vadd.f32 %v2193, %v2194
        %v2196 = vsel %vm2186, %v2154, 0.0
        %v2197 = vadd.f32 %v2195, %v2196
        %v2198 = vsel %vm2186, %v2158, 0.0
        %v2199 = vadd.f32 %v2197, %v2198
        %v2200 = vsel %vm2186, %v2162, 0.0
        %v2201 = vadd.f32 %v2199, %v2200
        %v2202 = vsel %vm2186, %v2166, 0.0
        %v2203 = vadd.f32 %v2201, %v2202
        %v2204 = vsel %vm2186, %v2170, 0.0
        %v2205 = vadd.f32 %v2203, %v2204
        %v2206 = vsel %vm2186, %v2174, 0.0
        %v2207 = vadd.f32 %v2205, %v2206
        %2208 = vadd.xlane.f32.xlu0 %v2207
        %v2209 = vpop.xlane.xlu0 %2208
        %v2210 = vld [vmem:[#allocation3] sm:$0x1]
        %v2211 = vadd.f32 %v2209, %v2210
        %2213 = vset.pattern.permute.xlu0 0
        %2214 = vperm.xlu0 %2213, %v2211
        %v2215 = vpop.permute.xlu0 %2214
        %2217 = vst [vmem:[%s304] sm:$0x1] %v2215
      $region56: #{custom_model_forward.1} parent=47 // pred_fallthru
        _
      %p2218 = scmp.lt.s32.totalorder %s24, 1
      %s2219 = scalar_select %p2218, %s24, 1
      %s2220 = scalar_lea.vmem %s7, %s2219
      // Predicated region
      $region57: #{custom_model_forward.1} parent=47 // pred_check
        %p2221 = pneg %p204
      $region58: #{custom_model_forward.1} parent=47 // pred_check_branch
        %2223 = sbr.rel (%p2221) target = $region60
      $region59: #{custom_model_forward.1} parent=47 // pred_region
        _
      $region60: #{custom_model_forward.1} parent=47 // pred_fallthru
        _
    $region48: #{custom_model_forward.1} parent=5 // pred_fallthru
      _
    %p2224 = scmp.le.s32.totalorder 2, %s15
    // Predicated region
    $region61: #{custom_model_forward.1} parent=5 // pred_check
      %p2225 = pneg %p2224
    $region62: #{custom_model_forward.1} parent=5 // pred_check_branch
      %2227 = sbr.rel (%p2225) target = $region64
    $region63: #{custom_model_forward.1} parent=5 // pred_region
      %s2228 = ssub.s32 %s15, 2
      // Predicated region
      $region65: #{custom_model_forward.1} parent=63 // pred_check
        %p2229 = pneg %p210
      $region66: #{custom_model_forward.1} parent=63 // pred_check_branch
        %2231 = sbr.rel (%p2229) target = $region68
      $region67: #{custom_model_forward.1} parent=63 // pred_region
        %p2232 = scmp.lt.s32.totalorder %s26, 1
        %s2233 = scalar_select %p2232, %s26, 1
        %s2234 = scalar_lea.vmem %s7, %s2233
      $region68: #{custom_model_forward.1} parent=63 // pred_fallthru
        _
    $region64: #{custom_model_forward.1} parent=5 // pred_fallthru
      _
  $region6: #{custom_model_forward.1} parent=0 // loop_footer
    %s19 = sadd.s32 1, %s15
  $region7: #{custom_model_forward.1} parent=0 // loop_footer_branch
    %14 = sbr.rel target = $region3
  $region8: #{custom_model_forward.1} parent=0 // loop_exit
    _

</llo_original>
